<compile_context>
chip_gen: v7x
topology: tpu7x:2x2x1
jax: 0.10.0
libtpu: 0.0.40
codegen_flags: <defaults>
</compile_context>

<pallas_src>
import jax
import jax.numpy as jnp
import numpy as np
from jax.experimental import pallas as pl
from jax.experimental.pallas import tpu as pltpu

EPS = 1e-5
K = 3            # all deconvs are 3x3
LANE = 128       # lane-padded width of every activation / tap block
LW = 3 * LANE    # slab width (widest constants: W2' and the R_cat blocks)


# ----------------------------- host-side packing -----------------------------

def _sel(h_in, out_h, pad):
    """sel[k, ih, o] = 1 iff tap k of output row o reads input row ih (stride 2)."""
    lo = K - 1 - pad
    sel = np.zeros((K, h_in, out_h), np.float32)
    for k in range(K):
        for o in range(out_h):
            t = o + k - lo
            if t >= 0 and t % 2 == 0 and t // 2 < h_in:
                sel[k, t // 2, o] = 1.0
    return sel


def _stage_consts(wt, tb, h_in, pad, opad):
    """ConvTranspose2d(stride=2) -> lane-padded R_cat (128, 384), bias row, msel."""
    wt = np.asarray(wt, np.float32)
    tb = np.asarray(tb, np.float32).reshape(-1)
    c_in, c_out = wt.shape[0], wt.shape[1]
    out_h = (h_in - 1) * 2 - 2 * pad + K + opad
    sel = _sel(h_in, out_h, pad)                      # square images -> reuse for width
    assert h_in * c_in <= LANE and out_h * c_out <= LANE
    rcat = np.zeros((LANE, 3 * LANE), np.float32)
    for kh in range(K):
        r = np.zeros((h_in * c_in, out_h * c_out), np.float32)
        for kw in range(K):
            r += np.kron(sel[kw], wt[:, :, K - 1 - kh, K - 1 - kw])
        rcat[: h_in * c_in, kh * LANE: kh * LANE + out_h * c_out] = r
    bias = np.zeros((1, LANE), np.float32)
    bias[0, : out_h * c_out] = np.tile(tb, out_h)
    msel = np.zeros((LANE, c_out), np.float32)        # pools (ow, co) columns -> co
    msel[: out_h * c_out, :] = np.tile(np.eye(c_out, dtype=np.float32), (out_h, 1))
    return rcat, bias, msel, out_h, c_out


def build_decoder_operands(params):
    """Weight-only preprocessing: fold perms/weights into matrices, pack ONE slab."""
    p = {k: np.asarray(v, np.float32) for k, v in params.items()}
    enc_dim = p["w1"].shape[0]

    rc1, bias1, msel1, oh1, co1 = _stage_consts(p["wt1"], p["tb1"], 3, 0, 0)
    rc2, bias2, msel2, oh2, co2 = _stage_consts(p["wt2"], p["tb2"], oh1, 1, 1)
    rc3, bias3, _, oh3, _ = _stage_consts(p["wt3"], p["tb3"], oh2, 1, 1)
    assert (oh1, oh2, oh3) == (7, 14, 28)

    g1, be1 = p["g1"].reshape(-1), p["be1"].reshape(-1)
    g2, be2 = p["g2"].reshape(-1), p["be2"].reshape(-1)
    mtg1 = (msel1 * g1[None, :]).T                    # (16,128) gamma folded in
    mtg2 = (msel2 * g2[None, :]).T                    # ( 8,128)
    bbeta1 = np.zeros((1, LANE), np.float32)
    bbeta1[0, : oh1 * co1] = np.tile(be1, oh1)
    bbeta2 = np.zeros((1, LANE), np.float32)
    bbeta2[0, : oh2 * co2] = np.tile(be2, oh2)

    # Fold the unflatten column permutation into W2/b2 (per-ih blocks, 128-lane pad).
    w2p = np.zeros((128, LW), np.float32)
    b2p = np.zeros((1, LW), np.float32)
    w2, b2 = p["w2"], p["b2"].reshape(1, -1)
    for ci in range(32):
        for ih in range(3):
            for iw in range(3):
                src = ci * 9 + ih * 3 + iw
                dst = ih * LANE + iw * 32 + ci
                w2p[:, dst] = w2[:, src]
                b2p[0, dst] = b2[0, src]

    # ---- pack everything into one (8,128)-aligned slab -> a single input DMA ----
    offs, parts = {}, []

    def add(name, mat):
        r, c = mat.shape
        buf = np.zeros((r + (-r % 8), LW), np.float32)
        buf[:r, :c] = mat
        offs[name] = sum(b.shape[0] for b in parts)
        parts.append(buf)

    vec = np.zeros((8, LW), np.float32)
    vec[0, :LANE] = p["b1"].reshape(-1)
    vec[1, :LANE] = bias1[0]
    vec[2, :LANE] = bias2[0]
    vec[3, :LANE] = bias3[0]
    vec[4, :LANE] = bbeta1[0]
    vec[5, :LANE] = bbeta2[0]
    vec[6, :] = b2p[0]
    add("vec", vec)
    add("w1", p["w1"])
    add("w2", w2p)
    add("r1", rc1)
    add("r2", rc2)
    add("r3", rc3)
    ms = np.zeros((LANE, LW), np.float32)
    ms[:, :co1] = msel1
    ms[:, LANE:LANE + co2] = msel2
    add("ms", ms)
    mt = np.zeros((co1 + co2, LANE), np.float32)
    mt[:co1] = mtg1
    mt[co1:] = mtg2
    add("mt", mt)

    slab = jnp.asarray(np.concatenate(parts, axis=0))
    return slab, offs, enc_dim, co1, co2


# ----------------------------- fused Pallas kernel -----------------------------

def _make_kernel(n_batch, enc_dim, offs, co1, co2):
    cnt1 = float(n_batch * 7 * 7)      # BN element count per channel, stage 1
    cnt2 = float(n_batch * 14 * 14)    # stage 2

    def gather_rows(p, h_in, out_h, lo):
        """Matmul-free row combine of the 3 tap blocks of P = (N*h_in, 3*128)."""
        n_even = (out_h + 1) // 2
        n_odd = out_h // 2
        blocks = []
        for n in range(n_batch):
            pk = [p[n * h_in:(n + 1) * h_in, k * LANE:(k + 1) * LANE]
                  for k in range(K)]
            even_terms, odd_terms = [], []
            for k in range(K):
                if (lo - k) % 2 == 0:           # output rows o = 2i read ih = i - d
                    d = (lo - k) // 2
                    r = min(h_in, n_even - d)
                    if r <= 0:
                        continue
                    parts = []
                    if d:
                        parts.append(jnp.zeros((d, LANE), jnp.float32))
                    parts.append(pk[k][:r, :])
                    if n_even - d - r:
                        parts.append(jnp.zeros((n_even - d - r, LANE), jnp.float32))
                    even_terms.append(parts[0] if len(parts) == 1
                                      else jnp.concatenate(parts, axis=0))
                else:                           # output rows o = 2i+1 read ih = i + e
                    e = (1 + k - lo) // 2
                    r = min(h_in - e, n_odd)
                    if r <= 0:
                        continue
                    parts = [pk[k][e:e + r, :]]
                    if n_odd - r:
                        parts.append(jnp.zeros((n_odd - r, LANE), jnp.float32))
                    odd_terms.append(parts[0] if len(parts) == 1
                                     else jnp.concatenate(parts, axis=0))
            even = even_terms[0]
            for t in even_terms[1:]:
                even = even + t
            odd = odd_terms[0]
            for t in odd_terms[1:]:
                odd = odd + t
            inter = []
            for i in range(n_odd):              # interleave even/odd output rows
                inter.append(even[i:i + 1, :])
                inter.append(odd[i:i + 1, :])
            if n_even > n_odd:
                inter.append(even[n_odd:n_even, :])
            blocks.append(jnp.concatenate(inter, axis=0))
        return jnp.concatenate(blocks, axis=0) if n_batch > 1 else blocks[0]

    def kernel(x_ref, slab_ref, out_ref):
        def mm(a, b):
            return jnp.dot(a, b, preferred_element_type=jnp.float32)

        vec = slab_ref[offs["vec"]:offs["vec"] + 8, :]
        b1, bias1 = vec[0:1, :LANE], vec[1:2, :LANE]
        bias2, bias3 = vec[2:3, :LANE], vec[3:4, :LANE]
        bbeta1, bbeta2 = vec[4:5, :LANE], vec[5:6, :LANE]
        b2 = vec[6:7, :]

        # decoder_lin: Linear(enc,128)+ReLU -> Linear(128, 288 perm/padded to 384)+ReLU
        w1 = slab_ref[offs["w1"]:offs["w1"] + enc_dim, :LANE]
        w2 = slab_ref[offs["w2"]:offs["w2"] + LANE, :]
        h = jnp.maximum(mm(x_ref[...], w1) + b1, 0.0)
        h = jnp.maximum(mm(h, w2) + b2, 0.0)                       # (N, 384)

        # Unflatten -> A (N*3, 128): rows (n, ih), cols (iw, ci) lane-padded
        rows = []
        for n in range(n_batch):
            for ih in range(K):
                rows.append(h[n:n + 1, ih * LANE:(ih + 1) * LANE])
        a = jnp.concatenate(rows, axis=0)

        def deconv(act, name, bias, h_in, out_h, lo):
            rcat = slab_ref[offs[name]:offs[name] + LANE, :]
            p = mm(act, rcat)                                       # one wide GEMM
            return gather_rows(p, h_in, out_h, lo) + bias

        def bn_relu(o, msel, mt, bbeta, cnt):
            s = jnp.concatenate([jnp.sum(o, axis=0, keepdims=True),
                                 jnp.sum(o * o, axis=0, keepdims=True)], axis=0)
            pooled = mm(s, msel) * (1.0 / cnt)                      # (2, C): mean, E[x^2]
            mean = pooled[0:1, :]
            var = jnp.maximum(pooled[1:2, :] - mean * mean, 0.0)    # biased variance
            r = jax.lax.rsqrt(var + EPS)
            sc = mm(jnp.concatenate([r, -mean * r], axis=0), mt)    # (2,128): scale/shift
            return jnp.maximum(o * sc[0:1, :] + sc[1:2, :] + bbeta, 0.0)

        msel1 = slab_ref[offs["ms"]:offs["ms"] + LANE, 0:co1]
        msel2 = slab_ref[offs["ms"]:offs["ms"] + LANE, LANE:LANE + co2]
        mt1 = slab_ref[offs["mt"]:offs["mt"] + co1, :LANE]
        mt2 = slab_ref[offs["mt"] + co1:offs["mt"] + co1 + co2, :LANE]

        o1 = bn_relu(deconv(a, "r1", bias1, 3, 7, 2), msel1, mt1, bbeta1, cnt1)
        o2 = bn_relu(deconv(o1, "r2", bias2, 7, 14, 1), msel2, mt2, bbeta2, cnt2)
        o3 = deconv(o2, "r3", bias3, 14, 28, 1)
        out_ref[...] = jax.nn.sigmoid(o3)

    return kernel


def make_decoder_fn(params, n_batch):
    slab, offs, enc_dim, co1, co2 = build_decoder_operands(params)
    kernel = _make_kernel(n_batch, enc_dim, offs, co1, co2)
    call = pl.pallas_call(
        kernel,
        out_shape=jax.ShapeDtypeStruct((n_batch * 28, LANE), jnp.float32),
        in_specs=[pl.BlockSpec(memory_space=pltpu.MemorySpace.VMEM),
                  pl.BlockSpec(memory_space=pltpu.MemorySpace.VMEM)],
        out_specs=pl.BlockSpec(memory_space=pltpu.MemorySpace.VMEM),
    )

    @jax.jit
    def forward(x):
        o = call(x, slab)                                 # (N*28, 128), lane-dense
        return o[:, :28].reshape(n_batch, 28, 28)[:, None, :, :]

    return forward


# ----------------------------- pure-JAX reference -----------------------------

def ref_deconv(x, wt, b, stride, padding, out_pad):
    w = jnp.transpose(jnp.flip(wt, axis=(2, 3)), (1, 0, 2, 3))  # OIHW
    lo, hi = K - 1 - padding, K - 1 - padding + out_pad
    y = jax.lax.conv_general_dilated(
        x, w, window_strides=(1, 1), padding=[(lo, hi), (lo, hi)],
        lhs_dilation=(stride, stride),
        dimension_numbers=("NCHW", "OIHW", "NCHW"))
    return y + b.reshape(1, -1, 1, 1)


def ref_bn(x, g, beta):
    mean = jnp.mean(x, axis=(0, 2, 3), keepdims=True)
    var = jnp.mean((x - mean) ** 2, axis=(0, 2, 3), keepdims=True)
    return g.reshape(1, -1, 1, 1) * (x - mean) / jnp.sqrt(var + EPS) + beta.reshape(1, -1, 1, 1)


def ref_forward(x, p):
    b = x.shape[0]
    h = jax.nn.relu(x @ p["w1"] + p["b1"])
    h = jax.nn.relu(h @ p["w2"] + p["b2"])
    y = h.reshape(b, 32, 3, 3)
    y = jax.nn.relu(ref_bn(ref_deconv(y, p["wt1"], p["tb1"], 2, 0, 0), p["g1"], p["be1"]))
    y = jax.nn.relu(ref_bn(ref_deconv(y, p["wt2"], p["tb2"], 2, 1, 1), p["g2"], p["be2"]))
    y = ref_deconv(y, p["wt3"], p["tb3"], 2, 1, 1)
    return jax.nn.sigmoid(y)


# ----------------------------- parameters & main -----------------------------

def init_params(enc_dim):
    ks = jax.random.split(jax.random.PRNGKey(0), 16)
    f32 = jnp.float32
    return {
        "w1": 0.2 * jax.random.normal(ks[0], (enc_dim, 128), f32),
        "b1": 0.1 * jax.random.normal(ks[1], (1, 128), f32),
        "w2": 0.1 * jax.random.normal(ks[2], (128, 3 * 3 * 32), f32),
        "b2": 0.1 * jax.random.normal(ks[3], (1, 3 * 3 * 32), f32),
        "wt1": 0.1 * jax.random.normal(ks[4], (32, 16, 3, 3), f32),
        "tb1": 0.1 * jax.random.normal(ks[5], (1, 16), f32),
        "g1": 1.0 + 0.1 * jax.random.normal(ks[6], (1, 16), f32),
        "be1": 0.1 * jax.random.normal(ks[7], (1, 16), f32),
        "wt2": 0.1 * jax.random.normal(ks[8], (16, 8, 3, 3), f32),
        "tb2": 0.1 * jax.random.normal(ks[9], (1, 8), f32),
        "g2": 1.0 + 0.1 * jax.random.normal(ks[10], (1, 8), f32),
        "be2": 0.1 * jax.random.normal(ks[11], (1, 8), f32),
        "wt3": 0.1 * jax.random.normal(ks[12], (8, 1, 3, 3), f32),
        "tb3": 0.1 * jax.random.normal(ks[13], (1, 1), f32),
    }


if __name__ == "__main__":
    B, ENC = 2, 4
    params = init_params(ENC)
    x = jax.random.normal(jax.random.PRNGKey(0), (B, ENC), jnp.float32)

    decoder = make_decoder_fn(params, B)
    out = jax.block_until_ready(decoder(x))
    assert out.shape == (B, 1, 28, 28), out.shape

    ref = jax.block_until_ready(ref_forward(x, params))
    np.testing.assert_allclose(np.asarray(out), np.asarray(ref), atol=1e-2, rtol=1e-2)

    print("KERNEL_OK")
</pallas_src>

<mosaic_0001>
module attributes {stable_mosaic.version = 11 : i64} {
  func.func @kernel(%arg0: memref<2x4xf32, #tpu.memory_space<vmem>>, %arg1: memref<680x384xf32, #tpu.memory_space<vmem>>, %arg2: memref<56x128xf32, #tpu.memory_space<vmem>>) attributes {dimension_semantics = [], scalar_prefetch = 0 : i64, scratch_operands = 0 : i64, tpu.core_type = #tpu.core_type<tc>} {
    %c0 = arith.constant 0 : index
    %c0_0 = arith.constant 0 : index
    %0 = vector.load %arg1[%c0, %c0_0] : memref<680x384xf32, #tpu.memory_space<vmem>>, vector<8x384xf32>
    %1 = vector.extract_strided_slice %0 {offsets = [0, 0], sizes = [1, 128], strides = [1, 1]} : vector<8x384xf32> to vector<1x128xf32>
    %2 = vector.extract_strided_slice %0 {offsets = [1, 0], sizes = [1, 128], strides = [1, 1]} : vector<8x384xf32> to vector<1x128xf32>
    %3 = vector.extract_strided_slice %0 {offsets = [2, 0], sizes = [1, 128], strides = [1, 1]} : vector<8x384xf32> to vector<1x128xf32>
    %4 = vector.extract_strided_slice %0 {offsets = [3, 0], sizes = [1, 128], strides = [1, 1]} : vector<8x384xf32> to vector<1x128xf32>
    %5 = vector.extract_strided_slice %0 {offsets = [4, 0], sizes = [1, 128], strides = [1, 1]} : vector<8x384xf32> to vector<1x128xf32>
    %6 = vector.extract_strided_slice %0 {offsets = [5, 0], sizes = [1, 128], strides = [1, 1]} : vector<8x384xf32> to vector<1x128xf32>
    %7 = vector.extract_strided_slice %0 {offsets = [6, 0], sizes = [1, 384], strides = [1, 1]} : vector<8x384xf32> to vector<1x384xf32>
    %c8 = arith.constant 8 : index
    %c0_1 = arith.constant 0 : index
    %8 = vector.load %arg1[%c8, %c0_1] : memref<680x384xf32, #tpu.memory_space<vmem>>, vector<4x128xf32>
    %c16 = arith.constant 16 : index
    %c0_2 = arith.constant 0 : index
    %9 = vector.load %arg1[%c16, %c0_2] : memref<680x384xf32, #tpu.memory_space<vmem>>, vector<128x384xf32>
    %c0_3 = arith.constant 0 : index
    %c0_4 = arith.constant 0 : index
    %10 = vector.load %arg0[%c0_3, %c0_4] : memref<2x4xf32, #tpu.memory_space<vmem>>, vector<2x4xf32>
    %cst = arith.constant dense<0.000000e+00> : vector<2x128xf32>
    %11 = tpu.matmul %10, %8, %cst {dimension_numbers = #tpu.dot_dimension_numbers<[1], [0], [0], [1], [0, 0, 1, 1], [], []>} : vector<2x4xf32>, vector<4x128xf32>, vector<2x128xf32> -> vector<2x128xf32>
    %12 = vector.broadcast %1 : vector<1x128xf32> to vector<2x128xf32>
    %13 = arith.addf %11, %12 : vector<2x128xf32>
    %cst_5 = arith.constant 0.000000e+00 : f32
    %14 = vector.broadcast %cst_5 : f32 to vector<2x128xf32>
    %15 = arith.maximumf %13, %14 : vector<2x128xf32>
    %cst_6 = arith.constant dense<0.000000e+00> : vector<2x384xf32>
    %16 = tpu.matmul %15, %9, %cst_6 {dimension_numbers = #tpu.dot_dimension_numbers<[1], [0], [0], [1], [0, 0, 1, 1], [], []>} : vector<2x128xf32>, vector<128x384xf32>, vector<2x384xf32> -> vector<2x384xf32>
    %17 = vector.broadcast %7 : vector<1x384xf32> to vector<2x384xf32>
    %18 = arith.addf %16, %17 : vector<2x384xf32>
    %cst_7 = arith.constant 0.000000e+00 : f32
    %19 = vector.broadcast %cst_7 : f32 to vector<2x384xf32>
    %20 = arith.maximumf %18, %19 : vector<2x384xf32>
    %21 = vector.extract_strided_slice %20 {offsets = [0, 0], sizes = [1, 128], strides = [1, 1]} : vector<2x384xf32> to vector<1x128xf32>
    %22 = vector.extract_strided_slice %20 {offsets = [0, 128], sizes = [1, 128], strides = [1, 1]} : vector<2x384xf32> to vector<1x128xf32>
    %23 = vector.extract_strided_slice %20 {offsets = [0, 256], sizes = [1, 128], strides = [1, 1]} : vector<2x384xf32> to vector<1x128xf32>
    %24 = vector.extract_strided_slice %20 {offsets = [1, 0], sizes = [1, 128], strides = [1, 1]} : vector<2x384xf32> to vector<1x128xf32>
    %25 = vector.extract_strided_slice %20 {offsets = [1, 128], sizes = [1, 128], strides = [1, 1]} : vector<2x384xf32> to vector<1x128xf32>
    %26 = vector.extract_strided_slice %20 {offsets = [1, 256], sizes = [1, 128], strides = [1, 1]} : vector<2x384xf32> to vector<1x128xf32>
    %27 = tpu.concatenate %21, %22, %23, %24, %25, %26 in 0 : vector<1x128xf32>, vector<1x128xf32>, vector<1x128xf32>, vector<1x128xf32>, vector<1x128xf32>, vector<1x128xf32> -> vector<6x128xf32>
    %c528 = arith.constant 528 : index
    %c0_8 = arith.constant 0 : index
    %28 = vector.load %arg1[%c528, %c0_8] : memref<680x384xf32, #tpu.memory_space<vmem>>, vector<128x16xf32>
    %c528_9 = arith.constant 528 : index
    %c128 = arith.constant 128 : index
    %29 = vector.load %arg1[%c528_9, %c128] : memref<680x384xf32, #tpu.memory_space<vmem>>, vector<128x8xf32>
    %c656 = arith.constant 656 : index
    %c0_10 = arith.constant 0 : index
    %30 = vector.load %arg1[%c656, %c0_10] : memref<680x384xf32, #tpu.memory_space<vmem>>, vector<16x128xf32>
    %c672 = arith.constant 672 : index
    %c0_11 = arith.constant 0 : index
    %31 = vector.load %arg1[%c672, %c0_11] : memref<680x384xf32, #tpu.memory_space<vmem>>, vector<8x128xf32>
    %c144 = arith.constant 144 : index
    %c0_12 = arith.constant 0 : index
    %32 = vector.load %arg1[%c144, %c0_12] : memref<680x384xf32, #tpu.memory_space<vmem>>, vector<128x384xf32>
    %cst_13 = arith.constant dense<0.000000e+00> : vector<6x384xf32>
    %33 = tpu.matmul %27, %32, %cst_13 {dimension_numbers = #tpu.dot_dimension_numbers<[1], [0], [0], [1], [0, 0, 1, 1], [], []>} : vector<6x128xf32>, vector<128x384xf32>, vector<6x384xf32> -> vector<6x384xf32>
    %34 = vector.extract_strided_slice %33 {offsets = [0, 0], sizes = [3, 128], strides = [1, 1]} : vector<6x384xf32> to vector<3x128xf32>
    %35 = vector.extract_strided_slice %33 {offsets = [0, 128], sizes = [3, 128], strides = [1, 1]} : vector<6x384xf32> to vector<3x128xf32>
    %36 = vector.extract_strided_slice %33 {offsets = [0, 256], sizes = [3, 128], strides = [1, 1]} : vector<6x384xf32> to vector<3x128xf32>
    %cst_14 = arith.constant 0.000000e+00 : f32
    %37 = vector.broadcast %cst_14 : f32 to vector<1x128xf32>
    %38 = tpu.concatenate %37, %34 in 0 : vector<1x128xf32>, vector<3x128xf32> -> vector<4x128xf32>
    %cst_15 = arith.constant 0.000000e+00 : f32
    %39 = vector.broadcast %cst_15 : f32 to vector<1x128xf32>
    %40 = tpu.concatenate %36, %39 in 0 : vector<3x128xf32>, vector<1x128xf32> -> vector<4x128xf32>
    %41 = arith.addf %38, %40 : vector<4x128xf32>
    %42 = vector.extract_strided_slice %41 {offsets = [0, 0], sizes = [1, 128], strides = [1, 1]} : vector<4x128xf32> to vector<1x128xf32>
    %43 = vector.extract_strided_slice %35 {offsets = [0, 0], sizes = [1, 128], strides = [1, 1]} : vector<3x128xf32> to vector<1x128xf32>
    %44 = vector.extract_strided_slice %41 {offsets = [1, 0], sizes = [1, 128], strides = [1, 1]} : vector<4x128xf32> to vector<1x128xf32>
    %45 = vector.extract_strided_slice %35 {offsets = [1, 0], sizes = [1, 128], strides = [1, 1]} : vector<3x128xf32> to vector<1x128xf32>
    %46 = vector.extract_strided_slice %41 {offsets = [2, 0], sizes = [1, 128], strides = [1, 1]} : vector<4x128xf32> to vector<1x128xf32>
    %47 = vector.extract_strided_slice %35 {offsets = [2, 0], sizes = [1, 128], strides = [1, 1]} : vector<3x128xf32> to vector<1x128xf32>
    %48 = vector.extract_strided_slice %41 {offsets = [3, 0], sizes = [1, 128], strides = [1, 1]} : vector<4x128xf32> to vector<1x128xf32>
    %49 = tpu.concatenate %42, %43, %44, %45, %46, %47, %48 in 0 : vector<1x128xf32>, vector<1x128xf32>, vector<1x128xf32>, vector<1x128xf32>, vector<1x128xf32>, vector<1x128xf32>, vector<1x128xf32> -> vector<7x128xf32>
    %50 = vector.extract_strided_slice %33 {offsets = [3, 0], sizes = [3, 128], strides = [1, 1]} : vector<6x384xf32> to vector<3x128xf32>
    %51 = vector.extract_strided_slice %33 {offsets = [3, 128], sizes = [3, 128], strides = [1, 1]} : vector<6x384xf32> to vector<3x128xf32>
    %52 = vector.extract_strided_slice %33 {offsets = [3, 256], sizes = [3, 128], strides = [1, 1]} : vector<6x384xf32> to vector<3x128xf32>
    %cst_16 = arith.constant 0.000000e+00 : f32
    %53 = vector.broadcast %cst_16 : f32 to vector<1x128xf32>
    %54 = tpu.concatenate %53, %50 in 0 : vector<1x128xf32>, vector<3x128xf32> -> vector<4x128xf32>
    %cst_17 = arith.constant 0.000000e+00 : f32
    %55 = vector.broadcast %cst_17 : f32 to vector<1x128xf32>
    %56 = tpu.concatenate %52, %55 in 0 : vector<3x128xf32>, vector<1x128xf32> -> vector<4x128xf32>
    %57 = arith.addf %54, %56 : vector<4x128xf32>
    %58 = vector.extract_strided_slice %57 {offsets = [0, 0], sizes = [1, 128], strides = [1, 1]} : vector<4x128xf32> to vector<1x128xf32>
    %59 = vector.extract_strided_slice %51 {offsets = [0, 0], sizes = [1, 128], strides = [1, 1]} : vector<3x128xf32> to vector<1x128xf32>
    %60 = vector.extract_strided_slice %57 {offsets = [1, 0], sizes = [1, 128], strides = [1, 1]} : vector<4x128xf32> to vector<1x128xf32>
    %61 = vector.extract_strided_slice %51 {offsets = [1, 0], sizes = [1, 128], strides = [1, 1]} : vector<3x128xf32> to vector<1x128xf32>
    %62 = vector.extract_strided_slice %57 {offsets = [2, 0], sizes = [1, 128], strides = [1, 1]} : vector<4x128xf32> to vector<1x128xf32>
    %63 = vector.extract_strided_slice %51 {offsets = [2, 0], sizes = [1, 128], strides = [1, 1]} : vector<3x128xf32> to vector<1x128xf32>
    %64 = vector.extract_strided_slice %57 {offsets = [3, 0], sizes = [1, 128], strides = [1, 1]} : vector<4x128xf32> to vector<1x128xf32>
    %65 = tpu.concatenate %58, %59, %60, %61, %62, %63, %64 in 0 : vector<1x128xf32>, vector<1x128xf32>, vector<1x128xf32>, vector<1x128xf32>, vector<1x128xf32>, vector<1x128xf32>, vector<1x128xf32> -> vector<7x128xf32>
    %66 = tpu.concatenate %49, %65 in 0 : vector<7x128xf32>, vector<7x128xf32> -> vector<14x128xf32>
    %67 = vector.broadcast %2 : vector<1x128xf32> to vector<14x128xf32>
    %68 = arith.addf %66, %67 : vector<14x128xf32>
    %cst_18 = arith.constant dense<0.000000e+00> : vector<128xf32>
    %69 = vector.multi_reduction <add>, %68, %cst_18 [0] : vector<14x128xf32> to vector<128xf32>
    %70 = vector.shape_cast %69 : vector<128xf32> to vector<1x128xf32>
    %71 = arith.mulf %68, %68 : vector<14x128xf32>
    %cst_19 = arith.constant dense<0.000000e+00> : vector<128xf32>
    %72 = vector.multi_reduction <add>, %71, %cst_19 [0] : vector<14x128xf32> to vector<128xf32>
    %73 = vector.shape_cast %72 : vector<128xf32> to vector<1x128xf32>
    %74 = tpu.concatenate %70, %73 in 0 : vector<1x128xf32>, vector<1x128xf32> -> vector<2x128xf32>
    %cst_20 = arith.constant dense<0.000000e+00> : vector<2x16xf32>
    %75 = tpu.matmul %74, %28, %cst_20 {dimension_numbers = #tpu.dot_dimension_numbers<[1], [0], [0], [1], [0, 0, 1, 1], [], []>} : vector<2x128xf32>, vector<128x16xf32>, vector<2x16xf32> -> vector<2x16xf32>
    %cst_21 = arith.constant 0.0102040814 : f32
    %76 = vector.broadcast %cst_21 : f32 to vector<2x16xf32>
    %77 = arith.mulf %75, %76 : vector<2x16xf32>
    %78 = vector.extract_strided_slice %77 {offsets = [0, 0], sizes = [1, 16], strides = [1, 1]} : vector<2x16xf32> to vector<1x16xf32>
    %79 = vector.extract_strided_slice %77 {offsets = [1, 0], sizes = [1, 16], strides = [1, 1]} : vector<2x16xf32> to vector<1x16xf32>
    %80 = arith.mulf %78, %78 : vector<1x16xf32>
    %81 = arith.subf %79, %80 : vector<1x16xf32>
    %cst_22 = arith.constant 0.000000e+00 : f32
    %82 = vector.broadcast %cst_22 : f32 to vector<1x16xf32>
    %83 = arith.maximumf %81, %82 : vector<1x16xf32>
    %cst_23 = arith.constant 9.99999974E-6 : f32
    %84 = vector.broadcast %cst_23 : f32 to vector<1x16xf32>
    %85 = arith.addf %83, %84 : vector<1x16xf32>
    %86 = math.rsqrt %85 : vector<1x16xf32>
    %cst_24 = arith.constant 0.000000e+00 : f32
    %87 = vector.broadcast %cst_24 : f32 to vector<1x16xf32>
    %88 = arith.subf %87, %78 : vector<1x16xf32>
    %89 = arith.mulf %88, %86 : vector<1x16xf32>
    %90 = tpu.concatenate %86, %89 in 0 : vector<1x16xf32>, vector<1x16xf32> -> vector<2x16xf32>
    %cst_25 = arith.constant dense<0.000000e+00> : vector<2x128xf32>
    %91 = tpu.matmul %90, %30, %cst_25 {dimension_numbers = #tpu.dot_dimension_numbers<[1], [0], [0], [1], [0, 0, 1, 1], [], []>} : vector<2x16xf32>, vector<16x128xf32>, vector<2x128xf32> -> vector<2x128xf32>
    %92 = vector.extract_strided_slice %91 {offsets = [0, 0], sizes = [1, 128], strides = [1, 1]} : vector<2x128xf32> to vector<1x128xf32>
    %93 = vector.broadcast %92 : vector<1x128xf32> to vector<14x128xf32>
    %94 = arith.mulf %68, %93 : vector<14x128xf32>
    %95 = vector.extract_strided_slice %91 {offsets = [1, 0], sizes = [1, 128], strides = [1, 1]} : vector<2x128xf32> to vector<1x128xf32>
    %96 = vector.broadcast %95 : vector<1x128xf32> to vector<14x128xf32>
    %97 = arith.addf %94, %96 : vector<14x128xf32>
    %98 = vector.broadcast %5 : vector<1x128xf32> to vector<14x128xf32>
    %99 = arith.addf %97, %98 : vector<14x128xf32>
    %cst_26 = arith.constant 0.000000e+00 : f32
    %100 = vector.broadcast %cst_26 : f32 to vector<14x128xf32>
    %101 = arith.maximumf %99, %100 : vector<14x128xf32>
    %c272 = arith.constant 272 : index
    %c0_27 = arith.constant 0 : index
    %102 = vector.load %arg1[%c272, %c0_27] : memref<680x384xf32, #tpu.memory_space<vmem>>, vector<128x384xf32>
    %cst_28 = arith.constant dense<0.000000e+00> : vector<14x384xf32>
    %103 = tpu.matmul %101, %102, %cst_28 {dimension_numbers = #tpu.dot_dimension_numbers<[1], [0], [0], [1], [0, 0, 1, 1], [], []>} : vector<14x128xf32>, vector<128x384xf32>, vector<14x384xf32> -> vector<14x384xf32>
    %104 = vector.extract_strided_slice %103 {offsets = [0, 0], sizes = [7, 128], strides = [1, 1]} : vector<14x384xf32> to vector<7x128xf32>
    %105 = vector.extract_strided_slice %103 {offsets = [0, 128], sizes = [7, 128], strides = [1, 1]} : vector<14x384xf32> to vector<7x128xf32>
    %106 = vector.extract_strided_slice %103 {offsets = [0, 256], sizes = [7, 128], strides = [1, 1]} : vector<14x384xf32> to vector<7x128xf32>
    %107 = vector.extract_strided_slice %106 {offsets = [1, 0], sizes = [6, 128], strides = [1, 1]} : vector<7x128xf32> to vector<6x128xf32>
    %cst_29 = arith.constant 0.000000e+00 : f32
    %108 = vector.broadcast %cst_29 : f32 to vector<1x128xf32>
    %109 = tpu.concatenate %107, %108 in 0 : vector<6x128xf32>, vector<1x128xf32> -> vector<7x128xf32>
    %110 = arith.addf %104, %109 : vector<7x128xf32>
    %111 = vector.extract_strided_slice %105 {offsets = [0, 0], sizes = [1, 128], strides = [1, 1]} : vector<7x128xf32> to vector<1x128xf32>
    %112 = vector.extract_strided_slice %110 {offsets = [0, 0], sizes = [1, 128], strides = [1, 1]} : vector<7x128xf32> to vector<1x128xf32>
    %113 = vector.extract_strided_slice %105 {offsets = [1, 0], sizes = [1, 128], strides = [1, 1]} : vector<7x128xf32> to vector<1x128xf32>
    %114 = vector.extract_strided_slice %110 {offsets = [1, 0], sizes = [1, 128], strides = [1, 1]} : vector<7x128xf32> to vector<1x128xf32>
    %115 = vector.extract_strided_slice %105 {offsets = [2, 0], sizes = [1, 128], strides = [1, 1]} : vector<7x128xf32> to vector<1x128xf32>
    %116 = vector.extract_strided_slice %110 {offsets = [2, 0], sizes = [1, 128], strides = [1, 1]} : vector<7x128xf32> to vector<1x128xf32>
    %117 = vector.extract_strided_slice %105 {offsets = [3, 0], sizes = [1, 128], strides = [1, 1]} : vector<7x128xf32> to vector<1x128xf32>
    %118 = vector.extract_strided_slice %110 {offsets = [3, 0], sizes = [1, 128], strides = [1, 1]} : vector<7x128xf32> to vector<1x128xf32>
    %119 = vector.extract_strided_slice %105 {offsets = [4, 0], sizes = [1, 128], strides = [1, 1]} : vector<7x128xf32> to vector<1x128xf32>
    %120 = vector.extract_strided_slice %110 {offsets = [4, 0], sizes = [1, 128], strides = [1, 1]} : vector<7x128xf32> to vector<1x128xf32>
    %121 = vector.extract_strided_slice %105 {offsets = [5, 0], sizes = [1, 128], strides = [1, 1]} : vector<7x128xf32> to vector<1x128xf32>
    %122 = vector.extract_strided_slice %110 {offsets = [5, 0], sizes = [1, 128], strides = [1, 1]} : vector<7x128xf32> to vector<1x128xf32>
    %123 = vector.extract_strided_slice %105 {offsets = [6, 0], sizes = [1, 128], strides = [1, 1]} : vector<7x128xf32> to vector<1x128xf32>
    %124 = vector.extract_strided_slice %110 {offsets = [6, 0], sizes = [1, 128], strides = [1, 1]} : vector<7x128xf32> to vector<1x128xf32>
    %125 = tpu.concatenate %111, %112, %113, %114, %115, %116, %117, %118, %119, %120, %121, %122, %123, %124 in 0 : vector<1x128xf32>, vector<1x128xf32>, vector<1x128xf32>, vector<1x128xf32>, vector<1x128xf32>, vector<1x128xf32>, vector<1x128xf32>, vector<1x128xf32>, vector<1x128xf32>, vector<1x128xf32>, vector<1x128xf32>, vector<1x128xf32>, vector<1x128xf32>, vector<1x128xf32> -> vector<14x128xf32>
    %126 = vector.extract_strided_slice %103 {offsets = [7, 0], sizes = [7, 128], strides = [1, 1]} : vector<14x384xf32> to vector<7x128xf32>
    %127 = vector.extract_strided_slice %103 {offsets = [7, 128], sizes = [7, 128], strides = [1, 1]} : vector<14x384xf32> to vector<7x128xf32>
    %128 = vector.extract_strided_slice %103 {offsets = [7, 256], sizes = [7, 128], strides = [1, 1]} : vector<14x384xf32> to vector<7x128xf32>
    %129 = vector.extract_strided_slice %128 {offsets = [1, 0], sizes = [6, 128], strides = [1, 1]} : vector<7x128xf32> to vector<6x128xf32>
    %cst_30 = arith.constant 0.000000e+00 : f32
    %130 = vector.broadcast %cst_30 : f32 to vector<1x128xf32>
    %131 = tpu.concatenate %129, %130 in 0 : vector<6x128xf32>, vector<1x128xf32> -> vector<7x128xf32>
    %132 = arith.addf %126, %131 : vector<7x128xf32>
    %133 = vector.extract_strided_slice %127 {offsets = [0, 0], sizes = [1, 128], strides = [1, 1]} : vector<7x128xf32> to vector<1x128xf32>
    %134 = vector.extract_strided_slice %132 {offsets = [0, 0], sizes = [1, 128], strides = [1, 1]} : vector<7x128xf32> to vector<1x128xf32>
    %135 = vector.extract_strided_slice %127 {offsets = [1, 0], sizes = [1, 128], strides = [1, 1]} : vector<7x128xf32> to vector<1x128xf32>
    %136 = vector.extract_strided_slice %132 {offsets = [1, 0], sizes = [1, 128], strides = [1, 1]} : vector<7x128xf32> to vector<1x128xf32>
    %137 = vector.extract_strided_slice %127 {offsets = [2, 0], sizes = [1, 128], strides = [1, 1]} : vector<7x128xf32> to vector<1x128xf32>
    %138 = vector.extract_strided_slice %132 {offsets = [2, 0], sizes = [1, 128], strides = [1, 1]} : vector<7x128xf32> to vector<1x128xf32>
    %139 = vector.extract_strided_slice %127 {offsets = [3, 0], sizes = [1, 128], strides = [1, 1]} : vector<7x128xf32> to vector<1x128xf32>
    %140 = vector.extract_strided_slice %132 {offsets = [3, 0], sizes = [1, 128], strides = [1, 1]} : vector<7x128xf32> to vector<1x128xf32>
    %141 = vector.extract_strided_slice %127 {offsets = [4, 0], sizes = [1, 128], strides = [1, 1]} : vector<7x128xf32> to vector<1x128xf32>
    %142 = vector.extract_strided_slice %132 {offsets = [4, 0], sizes = [1, 128], strides = [1, 1]} : vector<7x128xf32> to vector<1x128xf32>
    %143 = vector.extract_strided_slice %127 {offsets = [5, 0], sizes = [1, 128], strides = [1, 1]} : vector<7x128xf32> to vector<1x128xf32>
    %144 = vector.extract_strided_slice %132 {offsets = [5, 0], sizes = [1, 128], strides = [1, 1]} : vector<7x128xf32> to vector<1x128xf32>
    %145 = vector.extract_strided_slice %127 {offsets = [6, 0], sizes = [1, 128], strides = [1, 1]} : vector<7x128xf32> to vector<1x128xf32>
    %146 = vector.extract_strided_slice %132 {offsets = [6, 0], sizes = [1, 128], strides = [1, 1]} : vector<7x128xf32> to vector<1x128xf32>
    %147 = tpu.concatenate %133, %134, %135, %136, %137, %138, %139, %140, %141, %142, %143, %144, %145, %146 in 0 : vector<1x128xf32>, vector<1x128xf32>, vector<1x128xf32>, vector<1x128xf32>, vector<1x128xf32>, vector<1x128xf32>, vector<1x128xf32>, vector<1x128xf32>, vector<1x128xf32>, vector<1x128xf32>, vector<1x128xf32>, vector<1x128xf32>, vector<1x128xf32>, vector<1x128xf32> -> vector<14x128xf32>
    %148 = tpu.concatenate %125, %147 in 0 : vector<14x128xf32>, vector<14x128xf32> -> vector<28x128xf32>
    %149 = vector.broadcast %3 : vector<1x128xf32> to vector<28x128xf32>
    %150 = arith.addf %148, %149 : vector<28x128xf32>
    %cst_31 = arith.constant dense<0.000000e+00> : vector<128xf32>
    %151 = vector.multi_reduction <add>, %150, %cst_31 [0] : vector<28x128xf32> to vector<128xf32>
    %152 = vector.shape_cast %151 : vector<128xf32> to vector<1x128xf32>
    %153 = arith.mulf %150, %150 : vector<28x128xf32>
    %cst_32 = arith.constant dense<0.000000e+00> : vector<128xf32>
    %154 = vector.multi_reduction <add>, %153, %cst_32 [0] : vector<28x128xf32> to vector<128xf32>
    %155 = vector.shape_cast %154 : vector<128xf32> to vector<1x128xf32>
    %156 = tpu.concatenate %152, %155 in 0 : vector<1x128xf32>, vector<1x128xf32> -> vector<2x128xf32>
    %cst_33 = arith.constant dense<0.000000e+00> : vector<2x8xf32>
    %157 = tpu.matmul %156, %29, %cst_33 {dimension_numbers = #tpu.dot_dimension_numbers<[1], [0], [0], [1], [0, 0, 1, 1], [], []>} : vector<2x128xf32>, vector<128x8xf32>, vector<2x8xf32> -> vector<2x8xf32>
    %cst_34 = arith.constant 0.00255102036 : f32
    %158 = vector.broadcast %cst_34 : f32 to vector<2x8xf32>
    %159 = arith.mulf %157, %158 : vector<2x8xf32>
    %160 = vector.extract_strided_slice %159 {offsets = [0, 0], sizes = [1, 8], strides = [1, 1]} : vector<2x8xf32> to vector<1x8xf32>
    %161 = vector.extract_strided_slice %159 {offsets = [1, 0], sizes = [1, 8], strides = [1, 1]} : vector<2x8xf32> to vector<1x8xf32>
    %162 = arith.mulf %160, %160 : vector<1x8xf32>
    %163 = arith.subf %161, %162 : vector<1x8xf32>
    %cst_35 = arith.constant 0.000000e+00 : f32
    %164 = vector.broadcast %cst_35 : f32 to vector<1x8xf32>
    %165 = arith.maximumf %163, %164 : vector<1x8xf32>
    %cst_36 = arith.constant 9.99999974E-6 : f32
    %166 = vector.broadcast %cst_36 : f32 to vector<1x8xf32>
    %167 = arith.addf %165, %166 : vector<1x8xf32>
    %168 = math.rsqrt %167 : vector<1x8xf32>
    %cst_37 = arith.constant 0.000000e+00 : f32
    %169 = vector.broadcast %cst_37 : f32 to vector<1x8xf32>
    %170 = arith.subf %169, %160 : vector<1x8xf32>
    %171 = arith.mulf %170, %168 : vector<1x8xf32>
    %172 = tpu.concatenate %168, %171 in 0 : vector<1x8xf32>, vector<1x8xf32> -> vector<2x8xf32>
    %cst_38 = arith.constant dense<0.000000e+00> : vector<2x128xf32>
    %173 = tpu.matmul %172, %31, %cst_38 {dimension_numbers = #tpu.dot_dimension_numbers<[1], [0], [0], [1], [0, 0, 1, 1], [], []>} : vector<2x8xf32>, vector<8x128xf32>, vector<2x128xf32> -> vector<2x128xf32>
    %174 = vector.extract_strided_slice %173 {offsets = [0, 0], sizes = [1, 128], strides = [1, 1]} : vector<2x128xf32> to vector<1x128xf32>
    %175 = vector.broadcast %174 : vector<1x128xf32> to vector<28x128xf32>
    %176 = arith.mulf %150, %175 : vector<28x128xf32>
    %177 = vector.extract_strided_slice %173 {offsets = [1, 0], sizes = [1, 128], strides = [1, 1]} : vector<2x128xf32> to vector<1x128xf32>
    %178 = vector.broadcast %177 : vector<1x128xf32> to vector<28x128xf32>
    %179 = arith.addf %176, %178 : vector<28x128xf32>
    %180 = vector.broadcast %6 : vector<1x128xf32> to vector<28x128xf32>
    %181 = arith.addf %179, %180 : vector<28x128xf32>
    %cst_39 = arith.constant 0.000000e+00 : f32
    %182 = vector.broadcast %cst_39 : f32 to vector<28x128xf32>
    %183 = arith.maximumf %181, %182 : vector<28x128xf32>
    %c400 = arith.constant 400 : index
    %c0_40 = arith.constant 0 : index
    %184 = vector.load %arg1[%c400, %c0_40] : memref<680x384xf32, #tpu.memory_space<vmem>>, vector<128x384xf32>
    %cst_41 = arith.constant dense<0.000000e+00> : vector<28x384xf32>
    %185 = tpu.matmul %183, %184, %cst_41 {dimension_numbers = #tpu.dot_dimension_numbers<[1], [0], [0], [1], [0, 0, 1, 1], [], []>} : vector<28x128xf32>, vector<128x384xf32>, vector<28x384xf32> -> vector<28x384xf32>
    %186 = vector.extract_strided_slice %185 {offsets = [0, 0], sizes = [14, 128], strides = [1, 1]} : vector<28x384xf32> to vector<14x128xf32>
    %187 = vector.extract_strided_slice %185 {offsets = [0, 128], sizes = [14, 128], strides = [1, 1]} : vector<28x384xf32> to vector<14x128xf32>
    %188 = vector.extract_strided_slice %185 {offsets = [0, 256], sizes = [14, 128], strides = [1, 1]} : vector<28x384xf32> to vector<14x128xf32>
    %189 = vector.extract_strided_slice %188 {offsets = [1, 0], sizes = [13, 128], strides = [1, 1]} : vector<14x128xf32> to vector<13x128xf32>
    %cst_42 = arith.constant 0.000000e+00 : f32
    %190 = vector.broadcast %cst_42 : f32 to vector<1x128xf32>
    %191 = tpu.concatenate %189, %190 in 0 : vector<13x128xf32>, vector<1x128xf32> -> vector<14x128xf32>
    %192 = arith.addf %186, %191 : vector<14x128xf32>
    %193 = vector.extract_strided_slice %187 {offsets = [0, 0], sizes = [1, 128], strides = [1, 1]} : vector<14x128xf32> to vector<1x128xf32>
    %194 = vector.extract_strided_slice %192 {offsets = [0, 0], sizes = [1, 128], strides = [1, 1]} : vector<14x128xf32> to vector<1x128xf32>
    %195 = vector.extract_strided_slice %187 {offsets = [1, 0], sizes = [1, 128], strides = [1, 1]} : vector<14x128xf32> to vector<1x128xf32>
    %196 = vector.extract_strided_slice %192 {offsets = [1, 0], sizes = [1, 128], strides = [1, 1]} : vector<14x128xf32> to vector<1x128xf32>
    %197 = vector.extract_strided_slice %187 {offsets = [2, 0], sizes = [1, 128], strides = [1, 1]} : vector<14x128xf32> to vector<1x128xf32>
    %198 = vector.extract_strided_slice %192 {offsets = [2, 0], sizes = [1, 128], strides = [1, 1]} : vector<14x128xf32> to vector<1x128xf32>
    %199 = vector.extract_strided_slice %187 {offsets = [3, 0], sizes = [1, 128], strides = [1, 1]} : vector<14x128xf32> to vector<1x128xf32>
    %200 = vector.extract_strided_slice %192 {offsets = [3, 0], sizes = [1, 128], strides = [1, 1]} : vector<14x128xf32> to vector<1x128xf32>
    %201 = vector.extract_strided_slice %187 {offsets = [4, 0], sizes = [1, 128], strides = [1, 1]} : vector<14x128xf32> to vector<1x128xf32>
    %202 = vector.extract_strided_slice %192 {offsets = [4, 0], sizes = [1, 128], strides = [1, 1]} : vector<14x128xf32> to vector<1x128xf32>
    %203 = vector.extract_strided_slice %187 {offsets = [5, 0], sizes = [1, 128], strides = [1, 1]} : vector<14x128xf32> to vector<1x128xf32>
    %204 = vector.extract_strided_slice %192 {offsets = [5, 0], sizes = [1, 128], strides = [1, 1]} : vector<14x128xf32> to vector<1x128xf32>
    %205 = vector.extract_strided_slice %187 {offsets = [6, 0], sizes = [1, 128], strides = [1, 1]} : vector<14x128xf32> to vector<1x128xf32>
    %206 = vector.extract_strided_slice %192 {offsets = [6, 0], sizes = [1, 128], strides = [1, 1]} : vector<14x128xf32> to vector<1x128xf32>
    %207 = vector.extract_strided_slice %187 {offsets = [7, 0], sizes = [1, 128], strides = [1, 1]} : vector<14x128xf32> to vector<1x128xf32>
    %208 = vector.extract_strided_slice %192 {offsets = [7, 0], sizes = [1, 128], strides = [1, 1]} : vector<14x128xf32> to vector<1x128xf32>
    %209 = vector.extract_strided_slice %187 {offsets = [8, 0], sizes = [1, 128], strides = [1, 1]} : vector<14x128xf32> to vector<1x128xf32>
    %210 = vector.extract_strided_slice %192 {offsets = [8, 0], sizes = [1, 128], strides = [1, 1]} : vector<14x128xf32> to vector<1x128xf32>
    %211 = vector.extract_strided_slice %187 {offsets = [9, 0], sizes = [1, 128], strides = [1, 1]} : vector<14x128xf32> to vector<1x128xf32>
    %212 = vector.extract_strided_slice %192 {offsets = [9, 0], sizes = [1, 128], strides = [1, 1]} : vector<14x128xf32> to vector<1x128xf32>
    %213 = vector.extract_strided_slice %187 {offsets = [10, 0], sizes = [1, 128], strides = [1, 1]} : vector<14x128xf32> to vector<1x128xf32>
    %214 = vector.extract_strided_slice %192 {offsets = [10, 0], sizes = [1, 128], strides = [1, 1]} : vector<14x128xf32> to vector<1x128xf32>
    %215 = vector.extract_strided_slice %187 {offsets = [11, 0], sizes = [1, 128], strides = [1, 1]} : vector<14x128xf32> to vector<1x128xf32>
    %216 = vector.extract_strided_slice %192 {offsets = [11, 0], sizes = [1, 128], strides = [1, 1]} : vector<14x128xf32> to vector<1x128xf32>
    %217 = vector.extract_strided_slice %187 {offsets = [12, 0], sizes = [1, 128], strides = [1, 1]} : vector<14x128xf32> to vector<1x128xf32>
    %218 = vector.extract_strided_slice %192 {offsets = [12, 0], sizes = [1, 128], strides = [1, 1]} : vector<14x128xf32> to vector<1x128xf32>
    %219 = vector.extract_strided_slice %187 {offsets = [13, 0], sizes = [1, 128], strides = [1, 1]} : vector<14x128xf32> to vector<1x128xf32>
    %220 = vector.extract_strided_slice %192 {offsets = [13, 0], sizes = [1, 128], strides = [1, 1]} : vector<14x128xf32> to vector<1x128xf32>
    %221 = tpu.concatenate %193, %194, %195, %196, %197, %198, %199, %200, %201, %202, %203, %204, %205, %206, %207, %208 in 0 : vector<1x128xf32>, vector<1x128xf32>, vector<1x128xf32>, vector<1x128xf32>, vector<1x128xf32>, vector<1x128xf32>, vector<1x128xf32>, vector<1x128xf32>, vector<1x128xf32>, vector<1x128xf32>, vector<1x128xf32>, vector<1x128xf32>, vector<1x128xf32>, vector<1x128xf32>, vector<1x128xf32>, vector<1x128xf32> -> vector<16x128xf32>
    %222 = tpu.concatenate %209, %210, %211, %212, %213, %214, %215, %216, %217, %218, %219, %220 in 0 : vector<1x128xf32>, vector<1x128xf32>, vector<1x128xf32>, vector<1x128xf32>, vector<1x128xf32>, vector<1x128xf32>, vector<1x128xf32>, vector<1x128xf32>, vector<1x128xf32>, vector<1x128xf32>, vector<1x128xf32>, vector<1x128xf32> -> vector<12x128xf32>
    %223 = tpu.concatenate %221, %222 in 0 : vector<16x128xf32>, vector<12x128xf32> -> vector<28x128xf32>
    %224 = vector.extract_strided_slice %185 {offsets = [14, 0], sizes = [14, 128], strides = [1, 1]} : vector<28x384xf32> to vector<14x128xf32>
    %225 = vector.extract_strided_slice %185 {offsets = [14, 128], sizes = [14, 128], strides = [1, 1]} : vector<28x384xf32> to vector<14x128xf32>
    %226 = vector.extract_strided_slice %185 {offsets = [14, 256], sizes = [14, 128], strides = [1, 1]} : vector<28x384xf32> to vector<14x128xf32>
    %227 = vector.extract_strided_slice %226 {offsets = [1, 0], sizes = [13, 128], strides = [1, 1]} : vector<14x128xf32> to vector<13x128xf32>
    %cst_43 = arith.constant 0.000000e+00 : f32
    %228 = vector.broadcast %cst_43 : f32 to vector<1x128xf32>
    %229 = tpu.concatenate %227, %228 in 0 : vector<13x128xf32>, vector<1x128xf32> -> vector<14x128xf32>
    %230 = arith.addf %224, %229 : vector<14x128xf32>
    %231 = vector.extract_strided_slice %225 {offsets = [0, 0], sizes = [1, 128], strides = [1, 1]} : vector<14x128xf32> to vector<1x128xf32>
    %232 = vector.extract_strided_slice %230 {offsets = [0, 0], sizes = [1, 128], strides = [1, 1]} : vector<14x128xf32> to vector<1x128xf32>
    %233 = vector.extract_strided_slice %225 {offsets = [1, 0], sizes = [1, 128], strides = [1, 1]} : vector<14x128xf32> to vector<1x128xf32>
    %234 = vector.extract_strided_slice %230 {offsets = [1, 0], sizes = [1, 128], strides = [1, 1]} : vector<14x128xf32> to vector<1x128xf32>
    %235 = vector.extract_strided_slice %225 {offsets = [2, 0], sizes = [1, 128], strides = [1, 1]} : vector<14x128xf32> to vector<1x128xf32>
    %236 = vector.extract_strided_slice %230 {offsets = [2, 0], sizes = [1, 128], strides = [1, 1]} : vector<14x128xf32> to vector<1x128xf32>
    %237 = vector.extract_strided_slice %225 {offsets = [3, 0], sizes = [1, 128], strides = [1, 1]} : vector<14x128xf32> to vector<1x128xf32>
    %238 = vector.extract_strided_slice %230 {offsets = [3, 0], sizes = [1, 128], strides = [1, 1]} : vector<14x128xf32> to vector<1x128xf32>
    %239 = vector.extract_strided_slice %225 {offsets = [4, 0], sizes = [1, 128], strides = [1, 1]} : vector<14x128xf32> to vector<1x128xf32>
    %240 = vector.extract_strided_slice %230 {offsets = [4, 0], sizes = [1, 128], strides = [1, 1]} : vector<14x128xf32> to vector<1x128xf32>
    %241 = vector.extract_strided_slice %225 {offsets = [5, 0], sizes = [1, 128], strides = [1, 1]} : vector<14x128xf32> to vector<1x128xf32>
    %242 = vector.extract_strided_slice %230 {offsets = [5, 0], sizes = [1, 128], strides = [1, 1]} : vector<14x128xf32> to vector<1x128xf32>
    %243 = vector.extract_strided_slice %225 {offsets = [6, 0], sizes = [1, 128], strides = [1, 1]} : vector<14x128xf32> to vector<1x128xf32>
    %244 = vector.extract_strided_slice %230 {offsets = [6, 0], sizes = [1, 128], strides = [1, 1]} : vector<14x128xf32> to vector<1x128xf32>
    %245 = vector.extract_strided_slice %225 {offsets = [7, 0], sizes = [1, 128], strides = [1, 1]} : vector<14x128xf32> to vector<1x128xf32>
    %246 = vector.extract_strided_slice %230 {offsets = [7, 0], sizes = [1, 128], strides = [1, 1]} : vector<14x128xf32> to vector<1x128xf32>
    %247 = vector.extract_strided_slice %225 {offsets = [8, 0], sizes = [1, 128], strides = [1, 1]} : vector<14x128xf32> to vector<1x128xf32>
    %248 = vector.extract_strided_slice %230 {offsets = [8, 0], sizes = [1, 128], strides = [1, 1]} : vector<14x128xf32> to vector<1x128xf32>
    %249 = vector.extract_strided_slice %225 {offsets = [9, 0], sizes = [1, 128], strides = [1, 1]} : vector<14x128xf32> to vector<1x128xf32>
    %250 = vector.extract_strided_slice %230 {offsets = [9, 0], sizes = [1, 128], strides = [1, 1]} : vector<14x128xf32> to vector<1x128xf32>
    %251 = vector.extract_strided_slice %225 {offsets = [10, 0], sizes = [1, 128], strides = [1, 1]} : vector<14x128xf32> to vector<1x128xf32>
    %252 = vector.extract_strided_slice %230 {offsets = [10, 0], sizes = [1, 128], strides = [1, 1]} : vector<14x128xf32> to vector<1x128xf32>
    %253 = vector.extract_strided_slice %225 {offsets = [11, 0], sizes = [1, 128], strides = [1, 1]} : vector<14x128xf32> to vector<1x128xf32>
    %254 = vector.extract_strided_slice %230 {offsets = [11, 0], sizes = [1, 128], strides = [1, 1]} : vector<14x128xf32> to vector<1x128xf32>
    %255 = vector.extract_strided_slice %225 {offsets = [12, 0], sizes = [1, 128], strides = [1, 1]} : vector<14x128xf32> to vector<1x128xf32>
    %256 = vector.extract_strided_slice %230 {offsets = [12, 0], sizes = [1, 128], strides = [1, 1]} : vector<14x128xf32> to vector<1x128xf32>
    %257 = vector.extract_strided_slice %225 {offsets = [13, 0], sizes = [1, 128], strides = [1, 1]} : vector<14x128xf32> to vector<1x128xf32>
    %258 = vector.extract_strided_slice %230 {offsets = [13, 0], sizes = [1, 128], strides = [1, 1]} : vector<14x128xf32> to vector<1x128xf32>
    %259 = tpu.concatenate %231, %232, %233, %234, %235, %236, %237, %238, %239, %240, %241, %242, %243, %244, %245, %246 in 0 : vector<1x128xf32>, vector<1x128xf32>, vector<1x128xf32>, vector<1x128xf32>, vector<1x128xf32>, vector<1x128xf32>, vector<1x128xf32>, vector<1x128xf32>, vector<1x128xf32>, vector<1x128xf32>, vector<1x128xf32>, vector<1x128xf32>, vector<1x128xf32>, vector<1x128xf32>, vector<1x128xf32>, vector<1x128xf32> -> vector<16x128xf32>
    %260 = tpu.concatenate %247, %248, %249, %250, %251, %252, %253, %254, %255, %256, %257, %258 in 0 : vector<1x128xf32>, vector<1x128xf32>, vector<1x128xf32>, vector<1x128xf32>, vector<1x128xf32>, vector<1x128xf32>, vector<1x128xf32>, vector<1x128xf32>, vector<1x128xf32>, vector<1x128xf32>, vector<1x128xf32>, vector<1x128xf32> -> vector<12x128xf32>
    %261 = tpu.concatenate %259, %260 in 0 : vector<16x128xf32>, vector<12x128xf32> -> vector<28x128xf32>
    %262 = tpu.concatenate %223, %261 in 0 : vector<28x128xf32>, vector<28x128xf32> -> vector<56x128xf32>
    %263 = vector.broadcast %4 : vector<1x128xf32> to vector<56x128xf32>
    %264 = arith.addf %262, %263 : vector<56x128xf32>
    %265 = arith.negf %264 : vector<56x128xf32>
    %266 = math.exp %265 : vector<56x128xf32>
    %cst_44 = arith.constant 1.000000e+00 : f32
    %267 = vector.broadcast %cst_44 : f32 to vector<56x128xf32>
    %268 = arith.addf %267, %266 : vector<56x128xf32>
    %269 = arith.divf %267, %268 : vector<56x128xf32>
    %c0_45 = arith.constant 0 : index
    %c0_46 = arith.constant 0 : index
    %270 = vector.load %arg2[%c0_45, %c0_46] : memref<56x128xf32, #tpu.memory_space<vmem>>, vector<56x128xf32>
    tpu.vector_store %arg2[%c0_45, %c0_46], %269 {strides = array<i32>} : memref<56x128xf32, #tpu.memory_space<vmem>>, vector<56x128xf32>,
    return
  }
}

</mosaic_0001>

<llo_original>
// kernel: forward.1
$region0: #{forward.1}
  #allocation0 [shape = 'u32[]', space=smem, size = 0x4, offset = 0x4, fixed_abs, tag = 'smem constant byte address 0x4 - core index']
  #allocation1 [shape = 'u32[144,128]{1,0:T(1,128)}', space=vmem, size = 0x12000, scoped, tag = 'internal scratch']
  %s0 = inlined_call_operand.hbm [shape: f32[2,4], index: 0, kind: input, shape index: {}]
  %s1 = inlined_call_operand.hbm [shape: f32[680,384], index: 1, kind: input, shape index: {}]
  %s2 = inlined_call_operand.hbm [shape: f32[56,128], index: 2, kind: output, shape index: {}]
  %s3 = sld [smem:[#allocation0]]
  $region26: #{forward.1} parent=0
    _
  %s5 = ssub.s32 1, %s3
  %s6 = scalar_select 0, %s5, %s3
  $region1: #{forward.1} parent=0
    #allocation2 [shape = 'u8[1024]{0}', space=vmem, size = 0x400, scoped, tag = 'input window, operand 0, single buffered']
    #allocation3 [shape = 's32[1]{0}', space=sflag, size = 0x4, scoped, tag = 'scoped memory for forward.1']
    #allocation4 [shape = 's32[1]{0}', space=sflag, size = 0x4, scoped, tag = 'scoped memory for forward.1']
    #allocation5 [shape = 'u8[1044480]{0}', space=vmem, size = 0xff000, scoped, tag = 'input window, operand 1, single buffered']
    #allocation6 [shape = 's32[1]{0}', space=sflag, size = 0x4, scoped, tag = 'scoped memory for forward.1']
    #allocation7 [shape = 'u8[28672]{0}', space=vmem, size = 0x7000, scoped, tag = 'output window, operand 0, single buffered']
    %7 = vsyncpa [#allocation3], 0
    %8 = vsyncpa [#allocation6], 0
    %9 = vsyncpa [#allocation4], 0
    // Predicated region
    $region2: #{forward.1} parent=1 // pred_check
      _
    $region3: #{forward.1} parent=1 // pred_check_branch
      %11 = sbr.rel (0) target = $region5
    $region4: #{forward.1} parent=1 // pred_region
      %s13 = ssub.s32 32, 32
      %14 = vsyncadd [#allocation3], %s13
      %s16 = sshll.u32 [#allocation2], 4
      %s17 = int_to_ptr.vmem [resolvable:$true] %s16
      %19 = dma.hbm_to_vmem [thread:$0]  %s0, 32, %s17, [#allocation3]
    $region5: #{forward.1} parent=1 // pred_fallthru
      _
    // Predicated region
    $region6: #{forward.1} parent=1 // pred_check
      _
    $region7: #{forward.1} parent=1 // pred_check_branch
      %21 = sbr.rel (0) target = $region9
    $region8: #{forward.1} parent=1 // pred_region
      %s23 = ssub.s32 32640, 32640
      %24 = vsyncadd [#allocation6], %s23
      %s25 = sshll.u32 [#allocation5], 4
      %s26 = int_to_ptr.vmem [resolvable:$true] %s25
      %31 = dma.hbm_to_vmem [thread:$0]  %s1, 32640, %s26, [#allocation6], 384, 384, 24
    $region9: #{forward.1} parent=1 // pred_fallthru
      _
    // Predicated region
    $region10: #{forward.1} parent=1 // pred_check
      _
    $region11: #{forward.1} parent=1 // pred_check_branch
      %33 = sbr.rel (0) target = $region13
    $region12: #{forward.1} parent=1 // pred_region
      %34 = dma.done [#allocation3], 32
    $region13: #{forward.1} parent=1 // pred_fallthru
      _
    // Predicated region
    $region14: #{forward.1} parent=1 // pred_check
      _
    $region15: #{forward.1} parent=1 // pred_check_branch
      %36 = sbr.rel (0) target = $region17
    $region16: #{forward.1} parent=1 // pred_region
      %37 = dma.done [#allocation6], 32640
    $region17: #{forward.1} parent=1 // pred_fallthru
      _
    %v38 = vld [vmem:[#allocation5] sm:$0xff]
    %v39 = vld [vmem:[#allocation5 + $0x8] sm:$0xff]
    %v40 = vld [vmem:[#allocation5 + $0x10] sm:$0xff]
    %v41 = vld [vmem:[#allocation5 + $0x18] sm:$0xf]
    %v42 = vld [vmem:[#allocation5 + $0x30] sm:$0xff]
    %v43 = vld [vmem:[#allocation5 + $0x38] sm:$0xff]
    %v44 = vld [vmem:[#allocation5 + $0x40] sm:$0xff]
    %v45 = vld [vmem:[#allocation5 + $0x48] sm:$0xff]
    %v46 = vld [vmem:[#allocation5 + $0x50] sm:$0xff]
    %v47 = vld [vmem:[#allocation5 + $0x58] sm:$0xff]
    %v48 = vld [vmem:[#allocation5 + $0x60] sm:$0xff]
    %v49 = vld [vmem:[#allocation5 + $0x68] sm:$0xff]
    %v50 = vld [vmem:[#allocation5 + $0x70] sm:$0xff]
    %v51 = vld [vmem:[#allocation5 + $0x78] sm:$0xff]
    %v52 = vld [vmem:[#allocation5 + $0x80] sm:$0xff]
    %v53 = vld [vmem:[#allocation5 + $0x88] sm:$0xff]
    %v54 = vld [vmem:[#allocation5 + $0x90] sm:$0xff]
    %v55 = vld [vmem:[#allocation5 + $0x98] sm:$0xff]
    %v56 = vld [vmem:[#allocation5 + $0xa0] sm:$0xff]
    %v57 = vld [vmem:[#allocation5 + $0xa8] sm:$0xff]
    %v58 = vld [vmem:[#allocation5 + $0xb0] sm:$0xff]
    %v59 = vld [vmem:[#allocation5 + $0xb8] sm:$0xff]
    %v60 = vld [vmem:[#allocation5 + $0xc0] sm:$0xff]
    %v61 = vld [vmem:[#allocation5 + $0xc8] sm:$0xff]
    %v62 = vld [vmem:[#allocation5 + $0xd0] sm:$0xff]
    %v63 = vld [vmem:[#allocation5 + $0xd8] sm:$0xff]
    %v64 = vld [vmem:[#allocation5 + $0xe0] sm:$0xff]
    %v65 = vld [vmem:[#allocation5 + $0xe8] sm:$0xff]
    %v66 = vld [vmem:[#allocation5 + $0xf0] sm:$0xff]
    %v67 = vld [vmem:[#allocation5 + $0xf8] sm:$0xff]
    %v68 = vld [vmem:[#allocation5 + $0x100] sm:$0xff]
    %v69 = vld [vmem:[#allocation5 + $0x108] sm:$0xff]
    %v70 = vld [vmem:[#allocation5 + $0x110] sm:$0xff]
    %v71 = vld [vmem:[#allocation5 + $0x118] sm:$0xff]
    %v72 = vld [vmem:[#allocation5 + $0x120] sm:$0xff]
    %v73 = vld [vmem:[#allocation5 + $0x128] sm:$0xff]
    %v74 = vld [vmem:[#allocation5 + $0x130] sm:$0xff]
    %v75 = vld [vmem:[#allocation5 + $0x138] sm:$0xff]
    %v76 = vld [vmem:[#allocation5 + $0x140] sm:$0xff]
    %v77 = vld [vmem:[#allocation5 + $0x148] sm:$0xff]
    %v78 = vld [vmem:[#allocation5 + $0x150] sm:$0xff]
    %v79 = vld [vmem:[#allocation5 + $0x158] sm:$0xff]
    %v80 = vld [vmem:[#allocation5 + $0x160] sm:$0xff]
    %v81 = vld [vmem:[#allocation5 + $0x168] sm:$0xff]
    %v82 = vld [vmem:[#allocation5 + $0x170] sm:$0xff]
    %v83 = vld [vmem:[#allocation5 + $0x178] sm:$0xff]
    %v84 = vld [vmem:[#allocation5 + $0x180] sm:$0xff]
    %v85 = vld [vmem:[#allocation5 + $0x188] sm:$0xff]
    %v86 = vld [vmem:[#allocation5 + $0x190] sm:$0xff]
    %v87 = vld [vmem:[#allocation5 + $0x198] sm:$0xff]
    %v88 = vld [vmem:[#allocation5 + $0x1a0] sm:$0xff]
    %v89 = vld [vmem:[#allocation5 + $0x1a8] sm:$0xff]
    %v90 = vld [vmem:[#allocation2] sm:$0x3]
    %v91 = vlaneseq
    %v92 = vshrl.u32 %v91, 7
    %v93 = vsub.s32 0, %v92
    %v94 = vrot.slane %v38, %v93
    %vm95 = vcmask 31744
    %v97 = vsel %vm95, %v90, 0
    %vm99 = vcmask 1043456
    %v101 = vsel %vm99, %v41, 0
    %103 = vmatprep.subr.mxu0 0.0
    %104 = vmatpush1.msra.mxu0 %v101
    %105 = vmatprep.subr.mxu0 0.0
    %106 = vmatpush1.msra.mxu0 0.0
    %107 = vmatprep.subr.mxu0 0.0
    %108 = vmatpush1.msra.mxu0 0.0
    %109 = vmatprep.subr.mxu0 0.0
    %110 = vmatpush1.msra.mxu0 0.0
    %111 = vmatprep.subr.mxu0 0.0
    %112 = vmatpush1.msra.mxu0 0.0
    %113 = vmatprep.subr.mxu0 0.0
    %114 = vmatpush1.msra.mxu0 0.0
    %115 = vmatprep.subr.mxu0 0.0
    %116 = vmatpush1.msra.mxu0 0.0
    %117 = vmatprep.subr.mxu0 0.0
    %118 = vmatpush1.msra.mxu0 0.0
    %119 = vmatprep.subr.mxu0 0.0
    %120 = vmatpush1.msra.mxu0 0.0
    %121 = vmatprep.subr.mxu0 0.0
    %122 = vmatpush1.msra.mxu0 0.0
    %123 = vmatprep.subr.mxu0 0.0
    %124 = vmatpush1.msra.mxu0 0.0
    %125 = vmatprep.subr.mxu0 0.0
    %126 = vmatpush1.msra.mxu0 0.0
    %127 = vmatprep.subr.mxu0 0.0
    %128 = vmatpush1.msra.mxu0 0.0
    %129 = vmatprep.subr.mxu0 0.0
    %130 = vmatpush1.msra.mxu0 0.0
    %131 = vmatprep.subr.mxu0 0.0
    %132 = vmatpush1.msra.mxu0 0.0
    %133 = vmatprep.subr.mxu0 0.0
    %134 = vmatpush1.msra.mxu0 0.0
    %135 = vmatprep.subr.mxu0 0.0
    %136 = vmatpush1.msra.mxu0 0.0
    %137 = vmatprep.subr.mxu0 0.0
    %138 = vmatpush1.msra.mxu0 0.0
    %139 = vmatprep.subr.mxu0 0.0
    %140 = vmatpush1.msra.mxu0 0.0
    %141 = vmatprep.subr.mxu0 0.0
    %142 = vmatpush1.msra.mxu0 0.0
    %143 = vmatprep.subr.mxu0 0.0
    %144 = vmatpush1.msra.mxu0 0.0
    %145 = vmatprep.subr.mxu0 0.0
    %146 = vmatpush1.msra.mxu0 0.0
    %147 = vmatprep.subr.mxu0 0.0
    %148 = vmatpush1.msra.mxu0 0.0
    %149 = vmatprep.subr.mxu0 0.0
    %150 = vmatpush1.msra.mxu0 0.0
    %151 = vmatprep.subr.mxu0 0.0
    %152 = vmatpush1.msra.mxu0 0.0
    %153 = vmatprep.subr.mxu0 0.0
    %154 = vmatpush1.msra.mxu0 0.0
    %155 = vmatprep.subr.mxu0 0.0
    %156 = vmatpush1.msra.mxu0 0.0
    %157 = vmatprep.subr.mxu0 0.0
    %158 = vmatpush1.msra.mxu0 0.0
    %159 = vmatprep.subr.mxu0 0.0
    %160 = vmatpush1.msra.mxu0 0.0
    %161 = vmatprep.subr.mxu0 0.0
    %162 = vmatpush1.msra.mxu0 0.0
    %163 = vmatprep.subr.mxu0 0.0
    %164 = vmatpush1.msra.mxu0 0.0
    %165 = vmatprep.subr.mxu0 0.0
    %166 = vmatpush1.msra.mxu0 0.0
    %167 = vmatprep.mubr.f32.mxu0 0.0
    %168 = vmatmul.mubr.f32.gmra.mrb[0].mxu0 %v97
    %v169 = vpop.f32.mrb[0].mxu0
    %v170 = vadd.f32 %v94, %v169
    %v171 = vpop.f32.mrb[0].mxu0
    %172 = vdwg.mxu0
    %v173 = vmax.f32 %v170, 0.0
    %v174 = vlaneseq
    %v175 = vshrl.u32 %v174, 7
    %v176 = vsub.s32 6, %v175
    %v177 = vrot.slane %v38, %v176
    %v178 = vlaneseq
    %v179 = vshrl.u32 %v178, 7
    %v180 = vsub.s32 6, %v179
    %v181 = vrot.slane %v39, %v180
    %v182 = vlaneseq
    %v183 = vshrl.u32 %v182, 7
    %v184 = vsub.s32 6, %v183
    %v185 = vrot.slane %v40, %v184
    %186 = vmatprep.subr.mxu0 %v43
    %187 = vmatpush1.msra.mxu0 %v42
    %188 = vmatprep.subr.mxu0 %v46
    %189 = vmatpush1.msra.mxu0 %v45
    %190 = vmatprep.subr.mxu0 %v49
    %191 = vmatpush1.msra.mxu0 %v48
    %192 = vmatprep.subr.mxu0 %v52
    %193 = vmatpush1.msra.mxu0 %v51
    %194 = vmatprep.subr.mxu0 %v55
    %195 = vmatpush1.msra.mxu0 %v54
    %196 = vmatprep.subr.mxu0 %v58
    %197 = vmatpush1.msra.mxu0 %v57
    %198 = vmatprep.subr.mxu0 %v61
    %199 = vmatpush1.msra.mxu0 %v60
    %200 = vmatprep.subr.mxu0 %v64
    %201 = vmatpush1.msra.mxu0 %v63
    %202 = vmatprep.subr.mxu0 %v67
    %203 = vmatpush1.msra.mxu0 %v66
    %204 = vmatprep.subr.mxu0 %v70
    %205 = vmatpush1.msra.mxu0 %v69
    %206 = vmatprep.subr.mxu0 %v73
    %207 = vmatpush1.msra.mxu0 %v72
    %208 = vmatprep.subr.mxu0 %v76
    %209 = vmatpush1.msra.mxu0 %v75
    %210 = vmatprep.subr.mxu0 %v79
    %211 = vmatpush1.msra.mxu0 %v78
    %212 = vmatprep.subr.mxu0 %v82
    %213 = vmatpush1.msra.mxu0 %v81
    %214 = vmatprep.subr.mxu0 %v85
    %215 = vmatpush1.msra.mxu0 %v84
    %216 = vmatprep.subr.mxu0 %v88
    %217 = vmatpush1.msra.mxu0 %v87
    %218 = vmatprep.subr.mxu0 0.0
    %219 = vmatpush1.msra.mxu0 0.0
    %220 = vmatprep.subr.mxu0 0.0
    %221 = vmatpush1.msra.mxu0 0.0
    %222 = vmatprep.subr.mxu0 0.0
    %223 = vmatpush1.msra.mxu0 0.0
    %224 = vmatprep.subr.mxu0 0.0
    %225 = vmatpush1.msra.mxu0 0.0
    %226 = vmatprep.subr.mxu0 0.0
    %227 = vmatpush1.msra.mxu0 0.0
    %228 = vmatprep.subr.mxu0 0.0
    %229 = vmatpush1.msra.mxu0 0.0
    %230 = vmatprep.subr.mxu0 0.0
    %231 = vmatpush1.msra.mxu0 0.0
    %232 = vmatprep.subr.mxu0 0.0
    %233 = vmatpush1.msra.mxu0 0.0
    %234 = vmatprep.subr.mxu0 0.0
    %235 = vmatpush1.msra.mxu0 0.0
    %236 = vmatprep.subr.mxu0 0.0
    %237 = vmatpush1.msra.mxu0 0.0
    %238 = vmatprep.subr.mxu0 0.0
    %239 = vmatpush1.msra.mxu0 0.0
    %240 = vmatprep.subr.mxu0 0.0
    %241 = vmatpush1.msra.mxu0 0.0
    %242 = vmatprep.subr.mxu0 0.0
    %243 = vmatpush1.msra.mxu0 0.0
    %244 = vmatprep.subr.mxu0 0.0
    %245 = vmatpush1.msra.mxu0 0.0
    %246 = vmatprep.subr.mxu0 0.0
    %247 = vmatpush1.msra.mxu0 0.0
    %248 = vmatprep.subr.mxu0 0.0
    %249 = vmatpush1.msra.mxu0 0.0
    %250 = vmatprep.mubr.f32.mxu0 0.0
    %251 = vmatmul.mubr.f32.gmra.mrb[0].mxu0 %v173
    %v252 = vpop.f32.mrb[0].mxu0
    %v253 = vadd.f32 %v177, %v252
    %v254 = vpop.f32.mrb[0].mxu0
    %v255 = vadd.f32 %v181, %v254
    %256 = vdwg.mxu0
    %257 = vmatprep.subr.mxu0 0.0
    %258 = vmatpush1.msra.mxu0 %v44
    %259 = vmatprep.subr.mxu0 0.0
    %260 = vmatpush1.msra.mxu0 %v47
    %261 = vmatprep.subr.mxu0 0.0
    %262 = vmatpush1.msra.mxu0 %v50
    %263 = vmatprep.subr.mxu0 0.0
    %264 = vmatpush1.msra.mxu0 %v53
    %265 = vmatprep.subr.mxu0 0.0
    %266 = vmatpush1.msra.mxu0 %v56
    %267 = vmatprep.subr.mxu0 0.0
    %268 = vmatpush1.msra.mxu0 %v59
    %269 = vmatprep.subr.mxu0 0.0
    %270 = vmatpush1.msra.mxu0 %v62
    %271 = vmatprep.subr.mxu0 0.0
    %272 = vmatpush1.msra.mxu0 %v65
    %273 = vmatprep.subr.mxu0 0.0
    %274 = vmatpush1.msra.mxu0 %v68
    %275 = vmatprep.subr.mxu0 0.0
    %276 = vmatpush1.msra.mxu0 %v71
    %277 = vmatprep.subr.mxu0 0.0
    %278 = vmatpush1.msra.mxu0 %v74
    %279 = vmatprep.subr.mxu0 0.0
    %280 = vmatpush1.msra.mxu0 %v77
    %281 = vmatprep.subr.mxu0 0.0
    %282 = vmatpush1.msra.mxu0 %v80
    %283 = vmatprep.subr.mxu0 0.0
    %284 = vmatpush1.msra.mxu0 %v83
    %285 = vmatprep.subr.mxu0 0.0
    %286 = vmatpush1.msra.mxu0 %v86
    %287 = vmatprep.subr.mxu0 0.0
    %288 = vmatpush1.msra.mxu0 %v89
    %289 = vmatprep.subr.mxu0 0.0
    %290 = vmatpush1.msra.mxu0 0.0
    %291 = vmatprep.subr.mxu0 0.0
    %292 = vmatpush1.msra.mxu0 0.0
    %293 = vmatprep.subr.mxu0 0.0
    %294 = vmatpush1.msra.mxu0 0.0
    %295 = vmatprep.subr.mxu0 0.0
    %296 = vmatpush1.msra.mxu0 0.0
    %297 = vmatprep.subr.mxu0 0.0
    %298 = vmatpush1.msra.mxu0 0.0
    %299 = vmatprep.subr.mxu0 0.0
    %300 = vmatpush1.msra.mxu0 0.0
    %301 = vmatprep.subr.mxu0 0.0
    %302 = vmatpush1.msra.mxu0 0.0
    %303 = vmatprep.subr.mxu0 0.0
    %304 = vmatpush1.msra.mxu0 0.0
    %305 = vmatprep.subr.mxu0 0.0
    %306 = vmatpush1.msra.mxu0 0.0
    %307 = vmatprep.subr.mxu0 0.0
    %308 = vmatpush1.msra.mxu0 0.0
    %309 = vmatprep.subr.mxu0 0.0
    %310 = vmatpush1.msra.mxu0 0.0
    %311 = vmatprep.subr.mxu0 0.0
    %312 = vmatpush1.msra.mxu0 0.0
    %313 = vmatprep.subr.mxu0 0.0
    %314 = vmatpush1.msra.mxu0 0.0
    %315 = vmatprep.subr.mxu0 0.0
    %316 = vmatpush1.msra.mxu0 0.0
    %317 = vmatprep.subr.mxu0 0.0
    %318 = vmatpush1.msra.mxu0 0.0
    %319 = vmatprep.subr.mxu0 0.0
    %320 = vmatpush1.msra.mxu0 0.0
    %321 = vmatprep.mubr.f32.mxu0 0.0
    %322 = vmatmul.mubr.f32.gmra.mrb[0].mxu0 %v173
    %v323 = vpop.f32.mrb[0].mxu0
    %v324 = vadd.f32 %v185, %v323
    %v325 = vpop.f32.mrb[0].mxu0
    %326 = vdwg.mxu0
    %v327 = vmax.f32 %v253, 0.0
    %v328 = vmax.f32 %v255, 0.0
    %v329 = vmax.f32 %v324, 0.0
    %v331 = vrot.slane %v328, 7
    %v334 = vrot.slane %v329, 6
    %v337 = vrot.slane %v327, 6
    %v339 = vrot.slane %v328, 5
    %v341 = vrot.slane %v329, 4
    %vm343 = vcmask 1040384
    %v344 = vsel %vm343, %v327, %v331
    %vm345 = vcmask 1041408
    %v346 = vsel %vm345, %v344, %v334
    %vm347 = vcmask 1042432
    %v348 = vsel %vm347, %v346, %v337
    %v349 = vsel %vm99, %v348, %v339
    %vm350 = vcmask 1044480
    %v351 = vsel %vm350, %v349, %v341
    %v352 = vld [vmem:[#allocation5 + $0x630] sm:$0xff]
    %v353 = vld [vmem:[#allocation5 + $0x648] sm:$0xff]
    %v354 = vld [vmem:[#allocation5 + $0x660] sm:$0xff]
    %v355 = vld [vmem:[#allocation5 + $0x678] sm:$0xff]
    %v356 = vld [vmem:[#allocation5 + $0x690] sm:$0xff]
    %v357 = vld [vmem:[#allocation5 + $0x6a8] sm:$0xff]
    %v358 = vld [vmem:[#allocation5 + $0x6c0] sm:$0xff]
    %v359 = vld [vmem:[#allocation5 + $0x6d8] sm:$0xff]
    %v360 = vld [vmem:[#allocation5 + $0x6f0] sm:$0xff]
    %v361 = vld [vmem:[#allocation5 + $0x708] sm:$0xff]
    %v362 = vld [vmem:[#allocation5 + $0x720] sm:$0xff]
    %v363 = vld [vmem:[#allocation5 + $0x738] sm:$0xff]
    %v364 = vld [vmem:[#allocation5 + $0x750] sm:$0xff]
    %v365 = vld [vmem:[#allocation5 + $0x768] sm:$0xff]
    %v366 = vld [vmem:[#allocation5 + $0x780] sm:$0xff]
    %v367 = vld [vmem:[#allocation5 + $0x798] sm:$0xff]
    %v368 = vld [vmem:[#allocation5 + $0x638] sm:$0xff]
    %v369 = vld [vmem:[#allocation5 + $0x650] sm:$0xff]
    %v370 = vld [vmem:[#allocation5 + $0x668] sm:$0xff]
    %v371 = vld [vmem:[#allocation5 + $0x680] sm:$0xff]
    %v372 = vld [vmem:[#allocation5 + $0x698] sm:$0xff]
    %v373 = vld [vmem:[#allocation5 + $0x6b0] sm:$0xff]
    %v374 = vld [vmem:[#allocation5 + $0x6c8] sm:$0xff]
    %v375 = vld [vmem:[#allocation5 + $0x6e0] sm:$0xff]
    %v376 = vld [vmem:[#allocation5 + $0x6f8] sm:$0xff]
    %v377 = vld [vmem:[#allocation5 + $0x710] sm:$0xff]
    %v378 = vld [vmem:[#allocation5 + $0x728] sm:$0xff]
    %v379 = vld [vmem:[#allocation5 + $0x740] sm:$0xff]
    %v380 = vld [vmem:[#allocation5 + $0x758] sm:$0xff]
    %v381 = vld [vmem:[#allocation5 + $0x770] sm:$0xff]
    %v382 = vld [vmem:[#allocation5 + $0x788] sm:$0xff]
    %v383 = vld [vmem:[#allocation5 + $0x7a0] sm:$0xff]
    %v384 = vld [vmem:[#allocation5 + $0x7b0] sm:$0xff]
    %v385 = vld [vmem:[#allocation5 + $0x7c8] sm:$0xff]
    %v386 = vld [vmem:[#allocation5 + $0x7e0] sm:$0xff]
    %v387 = vld [vmem:[#allocation5 + $0x1b0] sm:$0xff]
    %v388 = vld [vmem:[#allocation5 + $0x1b8] sm:$0xff]
    %v389 = vld [vmem:[#allocation5 + $0x1c0] sm:$0xff]
    %v390 = vld [vmem:[#allocation5 + $0x1c8] sm:$0xff]
    %v391 = vld [vmem:[#allocation5 + $0x1d0] sm:$0xff]
    %v392 = vld [vmem:[#allocation5 + $0x1d8] sm:$0xff]
    %v393 = vld [vmem:[#allocation5 + $0x1e0] sm:$0xff]
    %v394 = vld [vmem:[#allocation5 + $0x1e8] sm:$0xff]
    %v395 = vld [vmem:[#allocation5 + $0x1f0] sm:$0xff]
    %v396 = vld [vmem:[#allocation5 + $0x1f8] sm:$0xff]
    %v397 = vld [vmem:[#allocation5 + $0x200] sm:$0xff]
    %v398 = vld [vmem:[#allocation5 + $0x208] sm:$0xff]
    %v399 = vld [vmem:[#allocation5 + $0x210] sm:$0xff]
    %v400 = vld [vmem:[#allocation5 + $0x218] sm:$0xff]
    %v401 = vld [vmem:[#allocation5 + $0x220] sm:$0xff]
    %v402 = vld [vmem:[#allocation5 + $0x228] sm:$0xff]
    %v403 = vld [vmem:[#allocation5 + $0x230] sm:$0xff]
    %v404 = vld [vmem:[#allocation5 + $0x238] sm:$0xff]
    %v405 = vld [vmem:[#allocation5 + $0x240] sm:$0xff]
    %v406 = vld [vmem:[#allocation5 + $0x248] sm:$0xff]
    %v407 = vld [vmem:[#allocation5 + $0x250] sm:$0xff]
    %v408 = vld [vmem:[#allocation5 + $0x258] sm:$0xff]
    %v409 = vld [vmem:[#allocation5 + $0x260] sm:$0xff]
    %v410 = vld [vmem:[#allocation5 + $0x268] sm:$0xff]
    %v411 = vld [vmem:[#allocation5 + $0x270] sm:$0xff]
    %v412 = vld [vmem:[#allocation5 + $0x278] sm:$0xff]
    %v413 = vld [vmem:[#allocation5 + $0x280] sm:$0xff]
    %v414 = vld [vmem:[#allocation5 + $0x288] sm:$0xff]
    %v415 = vld [vmem:[#allocation5 + $0x290] sm:$0xff]
    %v416 = vld [vmem:[#allocation5 + $0x298] sm:$0xff]
    %v417 = vld [vmem:[#allocation5 + $0x2a0] sm:$0xff]
    %v418 = vld [vmem:[#allocation5 + $0x2a8] sm:$0xff]
    %v419 = vld [vmem:[#allocation5 + $0x2b0] sm:$0xff]
    %v420 = vld [vmem:[#allocation5 + $0x2b8] sm:$0xff]
    %v421 = vld [vmem:[#allocation5 + $0x2c0] sm:$0xff]
    %v422 = vld [vmem:[#allocation5 + $0x2c8] sm:$0xff]
    %v423 = vld [vmem:[#allocation5 + $0x2d0] sm:$0xff]
    %v424 = vld [vmem:[#allocation5 + $0x2d8] sm:$0xff]
    %v425 = vld [vmem:[#allocation5 + $0x2e0] sm:$0xff]
    %v426 = vld [vmem:[#allocation5 + $0x2e8] sm:$0xff]
    %v427 = vld [vmem:[#allocation5 + $0x2f0] sm:$0xff]
    %v428 = vld [vmem:[#allocation5 + $0x2f8] sm:$0xff]
    %v429 = vld [vmem:[#allocation5 + $0x300] sm:$0xff]
    %v430 = vld [vmem:[#allocation5 + $0x308] sm:$0xff]
    %v431 = vld [vmem:[#allocation5 + $0x310] sm:$0xff]
    %v432 = vld [vmem:[#allocation5 + $0x318] sm:$0xff]
    %v433 = vld [vmem:[#allocation5 + $0x320] sm:$0xff]
    %v434 = vld [vmem:[#allocation5 + $0x328] sm:$0xff]
    %435 = vmatprep.subr.mxu0 %v388
    %436 = vmatpush1.msra.mxu0 %v387
    %437 = vmatprep.subr.mxu0 %v391
    %438 = vmatpush1.msra.mxu0 %v390
    %439 = vmatprep.subr.mxu0 %v394
    %440 = vmatpush1.msra.mxu0 %v393
    %441 = vmatprep.subr.mxu0 %v397
    %442 = vmatpush1.msra.mxu0 %v396
    %443 = vmatprep.subr.mxu0 %v400
    %444 = vmatpush1.msra.mxu0 %v399
    %445 = vmatprep.subr.mxu0 %v403
    %446 = vmatpush1.msra.mxu0 %v402
    %447 = vmatprep.subr.mxu0 %v406
    %448 = vmatpush1.msra.mxu0 %v405
    %449 = vmatprep.subr.mxu0 %v409
    %450 = vmatpush1.msra.mxu0 %v408
    %451 = vmatprep.subr.mxu0 %v412
    %452 = vmatpush1.msra.mxu0 %v411
    %453 = vmatprep.subr.mxu0 %v415
    %454 = vmatpush1.msra.mxu0 %v414
    %455 = vmatprep.subr.mxu0 %v418
    %456 = vmatpush1.msra.mxu0 %v417
    %457 = vmatprep.subr.mxu0 %v421
    %458 = vmatpush1.msra.mxu0 %v420
    %459 = vmatprep.subr.mxu0 %v424
    %460 = vmatpush1.msra.mxu0 %v423
    %461 = vmatprep.subr.mxu0 %v427
    %462 = vmatpush1.msra.mxu0 %v426
    %463 = vmatprep.subr.mxu0 %v430
    %464 = vmatpush1.msra.mxu0 %v429
    %465 = vmatprep.subr.mxu0 %v433
    %466 = vmatpush1.msra.mxu0 %v432
    %467 = vmatprep.subr.mxu0 0.0
    %468 = vmatpush1.msra.mxu0 0.0
    %469 = vmatprep.subr.mxu0 0.0
    %470 = vmatpush1.msra.mxu0 0.0
    %471 = vmatprep.subr.mxu0 0.0
    %472 = vmatpush1.msra.mxu0 0.0
    %473 = vmatprep.subr.mxu0 0.0
    %474 = vmatpush1.msra.mxu0 0.0
    %475 = vmatprep.subr.mxu0 0.0
    %476 = vmatpush1.msra.mxu0 0.0
    %477 = vmatprep.subr.mxu0 0.0
    %478 = vmatpush1.msra.mxu0 0.0
    %479 = vmatprep.subr.mxu0 0.0
    %480 = vmatpush1.msra.mxu0 0.0
    %481 = vmatprep.subr.mxu0 0.0
    %482 = vmatpush1.msra.mxu0 0.0
    %483 = vmatprep.subr.mxu0 0.0
    %484 = vmatpush1.msra.mxu0 0.0
    %485 = vmatprep.subr.mxu0 0.0
    %486 = vmatpush1.msra.mxu0 0.0
    %487 = vmatprep.subr.mxu0 0.0
    %488 = vmatpush1.msra.mxu0 0.0
    %489 = vmatprep.subr.mxu0 0.0
    %490 = vmatpush1.msra.mxu0 0.0
    %491 = vmatprep.subr.mxu0 0.0
    %492 = vmatpush1.msra.mxu0 0.0
    %493 = vmatprep.subr.mxu0 0.0
    %494 = vmatpush1.msra.mxu0 0.0
    %495 = vmatprep.subr.mxu0 0.0
    %496 = vmatpush1.msra.mxu0 0.0
    %497 = vmatprep.subr.mxu0 0.0
    %498 = vmatpush1.msra.mxu0 0.0
    %499 = vmatprep.mubr.f32.mxu0 0.0
    %500 = vmatmul.mubr.f32.gmra.mrb[0].mxu0 %v351
    %v501 = vpop.f32.mrb[0].mxu0
    %v502 = vadd.f32 0.0, %v501
    %v503 = vpop.f32.mrb[0].mxu0
    %v504 = vadd.f32 0.0, %v503
    %505 = vdwg.mxu0
    %506 = vmatprep.subr.mxu0 0.0
    %507 = vmatpush1.msra.mxu0 %v389
    %508 = vmatprep.subr.mxu0 0.0
    %509 = vmatpush1.msra.mxu0 %v392
    %510 = vmatprep.subr.mxu0 0.0
    %511 = vmatpush1.msra.mxu0 %v395
    %512 = vmatprep.subr.mxu0 0.0
    %513 = vmatpush1.msra.mxu0 %v398
    %514 = vmatprep.subr.mxu0 0.0
    %515 = vmatpush1.msra.mxu0 %v401
    %516 = vmatprep.subr.mxu0 0.0
    %517 = vmatpush1.msra.mxu0 %v404
    %518 = vmatprep.subr.mxu0 0.0
    %519 = vmatpush1.msra.mxu0 %v407
    %520 = vmatprep.subr.mxu0 0.0
    %521 = vmatpush1.msra.mxu0 %v410
    %522 = vmatprep.subr.mxu0 0.0
    %523 = vmatpush1.msra.mxu0 %v413
    %524 = vmatprep.subr.mxu0 0.0
    %525 = vmatpush1.msra.mxu0 %v416
    %526 = vmatprep.subr.mxu0 0.0
    %527 = vmatpush1.msra.mxu0 %v419
    %528 = vmatprep.subr.mxu0 0.0
    %529 = vmatpush1.msra.mxu0 %v422
    %530 = vmatprep.subr.mxu0 0.0
    %531 = vmatpush1.msra.mxu0 %v425
    %532 = vmatprep.subr.mxu0 0.0
    %533 = vmatpush1.msra.mxu0 %v428
    %534 = vmatprep.subr.mxu0 0.0
    %535 = vmatpush1.msra.mxu0 %v431
    %536 = vmatprep.subr.mxu0 0.0
    %537 = vmatpush1.msra.mxu0 %v434
    %538 = vmatprep.subr.mxu0 0.0
    %539 = vmatpush1.msra.mxu0 0.0
    %540 = vmatprep.subr.mxu0 0.0
    %541 = vmatpush1.msra.mxu0 0.0
    %542 = vmatprep.subr.mxu0 0.0
    %543 = vmatpush1.msra.mxu0 0.0
    %544 = vmatprep.subr.mxu0 0.0
    %545 = vmatpush1.msra.mxu0 0.0
    %546 = vmatprep.subr.mxu0 0.0
    %547 = vmatpush1.msra.mxu0 0.0
    %548 = vmatprep.subr.mxu0 0.0
    %549 = vmatpush1.msra.mxu0 0.0
    %550 = vmatprep.subr.mxu0 0.0
    %551 = vmatpush1.msra.mxu0 0.0
    %552 = vmatprep.subr.mxu0 0.0
    %553 = vmatpush1.msra.mxu0 0.0
    %554 = vmatprep.subr.mxu0 0.0
    %555 = vmatpush1.msra.mxu0 0.0
    %556 = vmatprep.subr.mxu0 0.0
    %557 = vmatpush1.msra.mxu0 0.0
    %558 = vmatprep.subr.mxu0 0.0
    %559 = vmatpush1.msra.mxu0 0.0
    %560 = vmatprep.subr.mxu0 0.0
    %561 = vmatpush1.msra.mxu0 0.0
    %562 = vmatprep.subr.mxu0 0.0
    %563 = vmatpush1.msra.mxu0 0.0
    %564 = vmatprep.subr.mxu0 0.0
    %565 = vmatpush1.msra.mxu0 0.0
    %566 = vmatprep.subr.mxu0 0.0
    %567 = vmatpush1.msra.mxu0 0.0
    %568 = vmatprep.subr.mxu0 0.0
    %569 = vmatpush1.msra.mxu0 0.0
    %570 = vmatprep.mubr.f32.mxu0 0.0
    %571 = vmatmul.mubr.f32.gmra.mrb[0].mxu0 %v351
    %v572 = vpop.f32.mrb[0].mxu0
    %v573 = vadd.f32 0.0, %v572
    %v574 = vpop.f32.mrb[0].mxu0
    %575 = vdwg.mxu0
    %v577 = vrot.slane %v502, 7
    %v579 = vsel %vm343, 0.0, %v577
    %v580 = vsel %vm347, %v573, 0.0
    %v581 = vadd.f32 %v579, %v580
    %v583 = vrot.slane %v504, 7
    %v586 = vrot.slane %v581, 7
    %v588 = vrot.slane %v504, 6
    %v590 = vrot.slane %v581, 6
    %v592 = vrot.slane %v504, 5
    %v594 = vrot.slane %v581, 5
    %v596 = vsel %vm343, %v581, %v583
    %v597 = vsel %vm345, %v596, %v586
    %v598 = vsel %vm347, %v597, %v588
    %v599 = vsel %vm99, %v598, %v590
    %v600 = vsel %vm350, %v599, %v592
    %vm601 = vcmask 1045504
    %v602 = vsel %vm601, %v600, %v594
    %v603 = vrot.slane %v502, 2
    %v605 = vsel %vm343, 0.0, %v603
    %v607 = vrot.slane %v573, 3
    %v609 = vsel %vm347, %v607, 0.0
    %v610 = vadd.f32 %v605, %v609
    %v611 = vrot.slane %v504, 2
    %v614 = vrot.slane %v610, 7
    %v616 = vrot.slane %v504, 1
    %v618 = vrot.slane %v610, 6
    %v620 = vrot.slane %v610, 5
    %v622 = vsel %vm343, %v610, %v611
    %v623 = vsel %vm345, %v622, %v614
    %v624 = vsel %vm347, %v623, %v616
    %v625 = vsel %vm99, %v624, %v618
    %v626 = vsel %vm350, %v625, %v504
    %v627 = vsel %vm601, %v626, %v620
    %v629 = vrot.slane %v627, 1
    %vm631 = vcmask 1046528
    %v632 = vsel %vm631, %v602, %v629
    %v633 = vlaneseq
    %v634 = vshrl.u32 %v633, 7
    %v635 = vsub.s32 1, %v634
    %v636 = vrot.slane %v38, %v635
    %v637 = vadd.f32 %v632, %v636
    %v638 = vadd.f32 %v629, %v636
    %v639 = vsel %vm601, %v638, 0.0
    %v640 = vadd.f32 %v637, %v639
    %v641 = vrot.slane %v640, 4
    %v642 = vadd.f32 %v640, %v641
    %v643 = vrot.slane %v642, 2
    %v644 = vadd.f32 %v642, %v643
    %v645 = vrot.slane %v644, 1
    %v646 = vadd.f32 %v644, %v645
    %v647 = vmul.f32 %v637, %v637
    %v648 = vmul.f32 %v638, %v638
    %v649 = vsel %vm601, %v648, 0.0
    %v650 = vadd.f32 %v647, %v649
    %v651 = vrot.slane %v650, 4
    %v652 = vadd.f32 %v650, %v651
    %v653 = vrot.slane %v652, 2
    %v654 = vadd.f32 %v652, %v653
    %v655 = vrot.slane %v654, 1
    %v656 = vadd.f32 %v654, %v655
    %v657 = vsel %vm343, %v646, %v656
    %658 = vmatprep.subr.mxu0 0.0
    %659 = vmatpush1.msra.mxu0 %v352
    %660 = vmatprep.subr.mxu0 0.0
    %661 = vmatpush1.msra.mxu0 %v353
    %662 = vmatprep.subr.mxu0 0.0
    %663 = vmatpush1.msra.mxu0 %v354
    %664 = vmatprep.subr.mxu0 0.0
    %665 = vmatpush1.msra.mxu0 %v355
    %666 = vmatprep.subr.mxu0 0.0
    %667 = vmatpush1.msra.mxu0 %v356
    %668 = vmatprep.subr.mxu0 0.0
    %669 = vmatpush1.msra.mxu0 %v357
    %670 = vmatprep.subr.mxu0 0.0
    %671 = vmatpush1.msra.mxu0 %v358
    %672 = vmatprep.subr.mxu0 0.0
    %673 = vmatpush1.msra.mxu0 %v359
    %674 = vmatprep.subr.mxu0 0.0
    %675 = vmatpush1.msra.mxu0 %v360
    %676 = vmatprep.subr.mxu0 0.0
    %677 = vmatpush1.msra.mxu0 %v361
    %678 = vmatprep.subr.mxu0 0.0
    %679 = vmatpush1.msra.mxu0 %v362
    %680 = vmatprep.subr.mxu0 0.0
    %681 = vmatpush1.msra.mxu0 %v363
    %682 = vmatprep.subr.mxu0 0.0
    %683 = vmatpush1.msra.mxu0 %v364
    %684 = vmatprep.subr.mxu0 0.0
    %685 = vmatpush1.msra.mxu0 %v365
    %686 = vmatprep.subr.mxu0 0.0
    %687 = vmatpush1.msra.mxu0 %v366
    %688 = vmatprep.subr.mxu0 0.0
    %689 = vmatpush1.msra.mxu0 %v367
    %690 = vmatprep.subr.mxu0 0.0
    %691 = vmatpush1.msra.mxu0 0.0
    %692 = vmatprep.subr.mxu0 0.0
    %693 = vmatpush1.msra.mxu0 0.0
    %694 = vmatprep.subr.mxu0 0.0
    %695 = vmatpush1.msra.mxu0 0.0
    %696 = vmatprep.subr.mxu0 0.0
    %697 = vmatpush1.msra.mxu0 0.0
    %698 = vmatprep.subr.mxu0 0.0
    %699 = vmatpush1.msra.mxu0 0.0
    %700 = vmatprep.subr.mxu0 0.0
    %701 = vmatpush1.msra.mxu0 0.0
    %702 = vmatprep.subr.mxu0 0.0
    %703 = vmatpush1.msra.mxu0 0.0
    %704 = vmatprep.subr.mxu0 0.0
    %705 = vmatpush1.msra.mxu0 0.0
    %706 = vmatprep.subr.mxu0 0.0
    %707 = vmatpush1.msra.mxu0 0.0
    %708 = vmatprep.subr.mxu0 0.0
    %709 = vmatpush1.msra.mxu0 0.0
    %710 = vmatprep.subr.mxu0 0.0
    %711 = vmatpush1.msra.mxu0 0.0
    %712 = vmatprep.subr.mxu0 0.0
    %713 = vmatpush1.msra.mxu0 0.0
    %714 = vmatprep.subr.mxu0 0.0
    %715 = vmatpush1.msra.mxu0 0.0
    %716 = vmatprep.subr.mxu0 0.0
    %717 = vmatpush1.msra.mxu0 0.0
    %718 = vmatprep.subr.mxu0 0.0
    %719 = vmatpush1.msra.mxu0 0.0
    %720 = vmatprep.subr.mxu0 0.0
    %721 = vmatpush1.msra.mxu0 0.0
    %722 = vmatprep.mubr.f32.mxu0 0.0
    %723 = vmatmul.mubr.f32.gmra.mrb[0].mxu0 %v657
    %v724 = vpop.f32.mrb[0].mxu0
    %v725 = vadd.f32 0.0, %v724
    %v726 = vpop.f32.mrb[0].mxu0
    %727 = vdwg.mxu0
    %v728 = vmul.f32 %v725, 0.010204081
    %v729 = vmul.f32 %v728, %v728
    %v731 = vrot.slane %v729, 7
    %v733 = vsub.f32 %v728, %v731
    %v734 = vmax.f32 %v733, 0.0
    %v735 = vadd.f32 %v734, 1e-05
    %v736 = vrsqrt.pop %v735
    %v737 = vsub.f32 0.0, %v728
    %v739 = vrot.slane %v736, 1
    %v741 = vmul.f32 %v737, %v739
    %v743 = vrot.slane %v741, 7
    %v745 = vsel %vm343, %v739, %v743
    %vm746 = vcmask 130048
    %v748 = vsel %vm746, %v745, 0
    %750 = vmatprep.subr.mxu0 0.0
    %751 = vmatpush1.msra.mxu0 %v384
    %752 = vmatprep.subr.mxu0 0.0
    %753 = vmatpush1.msra.mxu0 %v385
    %754 = vmatprep.subr.mxu0 0.0
    %755 = vmatpush1.msra.mxu0 0.0
    %756 = vmatprep.subr.mxu0 0.0
    %757 = vmatpush1.msra.mxu0 0.0
    %758 = vmatprep.subr.mxu0 0.0
    %759 = vmatpush1.msra.mxu0 0.0
    %760 = vmatprep.subr.mxu0 0.0
    %761 = vmatpush1.msra.mxu0 0.0
    %762 = vmatprep.subr.mxu0 0.0
    %763 = vmatpush1.msra.mxu0 0.0
    %764 = vmatprep.subr.mxu0 0.0
    %765 = vmatpush1.msra.mxu0 0.0
    %766 = vmatprep.subr.mxu0 0.0
    %767 = vmatpush1.msra.mxu0 0.0
    %768 = vmatprep.subr.mxu0 0.0
    %769 = vmatpush1.msra.mxu0 0.0
    %770 = vmatprep.subr.mxu0 0.0
    %771 = vmatpush1.msra.mxu0 0.0
    %772 = vmatprep.subr.mxu0 0.0
    %773 = vmatpush1.msra.mxu0 0.0
    %774 = vmatprep.subr.mxu0 0.0
    %775 = vmatpush1.msra.mxu0 0.0
    %776 = vmatprep.subr.mxu0 0.0
    %777 = vmatpush1.msra.mxu0 0.0
    %778 = vmatprep.subr.mxu0 0.0
    %779 = vmatpush1.msra.mxu0 0.0
    %780 = vmatprep.subr.mxu0 0.0
    %781 = vmatpush1.msra.mxu0 0.0
    %782 = vmatprep.subr.mxu0 0.0
    %783 = vmatpush1.msra.mxu0 0.0
    %784 = vmatprep.subr.mxu0 0.0
    %785 = vmatpush1.msra.mxu0 0.0
    %786 = vmatprep.subr.mxu0 0.0
    %787 = vmatpush1.msra.mxu0 0.0
    %788 = vmatprep.subr.mxu0 0.0
    %789 = vmatpush1.msra.mxu0 0.0
    %790 = vmatprep.subr.mxu0 0.0
    %791 = vmatpush1.msra.mxu0 0.0
    %792 = vmatprep.subr.mxu0 0.0
    %793 = vmatpush1.msra.mxu0 0.0
    %794 = vmatprep.subr.mxu0 0.0
    %795 = vmatpush1.msra.mxu0 0.0
    %796 = vmatprep.subr.mxu0 0.0
    %797 = vmatpush1.msra.mxu0 0.0
    %798 = vmatprep.subr.mxu0 0.0
    %799 = vmatpush1.msra.mxu0 0.0
    %800 = vmatprep.subr.mxu0 0.0
    %801 = vmatpush1.msra.mxu0 0.0
    %802 = vmatprep.subr.mxu0 0.0
    %803 = vmatpush1.msra.mxu0 0.0
    %804 = vmatprep.subr.mxu0 0.0
    %805 = vmatpush1.msra.mxu0 0.0
    %806 = vmatprep.subr.mxu0 0.0
    %807 = vmatpush1.msra.mxu0 0.0
    %808 = vmatprep.subr.mxu0 0.0
    %809 = vmatpush1.msra.mxu0 0.0
    %810 = vmatprep.subr.mxu0 0.0
    %811 = vmatpush1.msra.mxu0 0.0
    %812 = vmatprep.subr.mxu0 0.0
    %813 = vmatpush1.msra.mxu0 0.0
    %814 = vmatprep.mubr.f32.mxu0 0.0
    %815 = vmatmul.mubr.f32.gmra.mrb[0].mxu0 %v748
    %v816 = vpop.f32.mrb[0].mxu0
    %v817 = vadd.f32 0.0, %v816
    %v818 = vpop.f32.mrb[0].mxu0
    %819 = vdwg.mxu0
    %v820 = vlaneseq
    %v821 = vshrl.u32 %v820, 7
    %v822 = vsub.s32 0, %v821
    %v823 = vrot.slane %v817, %v822
    %v824 = vmul.f32 %v637, %v823
    %v825 = vmul.f32 %v638, %v823
    %v826 = vlaneseq
    %v827 = vshrl.u32 %v826, 7
    %v828 = vsub.s32 1, %v827
    %v829 = vrot.slane %v817, %v828
    %v830 = vadd.f32 %v824, %v829
    %v831 = vadd.f32 %v825, %v829
    %v832 = vlaneseq
    %v833 = vshrl.u32 %v832, 7
    %v834 = vsub.s32 4, %v833
    %v835 = vrot.slane %v38, %v834
    %v836 = vadd.f32 %v830, %v835
    %v837 = vadd.f32 %v831, %v835
    %v838 = vmax.f32 %v836, 0.0
    %v839 = vmax.f32 %v837, 0.0
    %v840 = vld [vmem:[#allocation5 + $0x330] sm:$0xff]
    %v841 = vld [vmem:[#allocation5 + $0x338] sm:$0xff]
    %v842 = vld [vmem:[#allocation5 + $0x340] sm:$0xff]
    %v843 = vld [vmem:[#allocation5 + $0x348] sm:$0xff]
    %v844 = vld [vmem:[#allocation5 + $0x350] sm:$0xff]
    %v845 = vld [vmem:[#allocation5 + $0x358] sm:$0xff]
    %v846 = vld [vmem:[#allocation5 + $0x360] sm:$0xff]
    %v847 = vld [vmem:[#allocation5 + $0x368] sm:$0xff]
    %v848 = vld [vmem:[#allocation5 + $0x370] sm:$0xff]
    %v849 = vld [vmem:[#allocation5 + $0x378] sm:$0xff]
    %v850 = vld [vmem:[#allocation5 + $0x380] sm:$0xff]
    %v851 = vld [vmem:[#allocation5 + $0x388] sm:$0xff]
    %v852 = vld [vmem:[#allocation5 + $0x390] sm:$0xff]
    %v853 = vld [vmem:[#allocation5 + $0x398] sm:$0xff]
    %v854 = vld [vmem:[#allocation5 + $0x3a0] sm:$0xff]
    %v855 = vld [vmem:[#allocation5 + $0x3a8] sm:$0xff]
    %v856 = vld [vmem:[#allocation5 + $0x3b0] sm:$0xff]
    %v857 = vld [vmem:[#allocation5 + $0x3b8] sm:$0xff]
    %v858 = vld [vmem:[#allocation5 + $0x3c0] sm:$0xff]
    %v859 = vld [vmem:[#allocation5 + $0x3c8] sm:$0xff]
    %v860 = vld [vmem:[#allocation5 + $0x3d0] sm:$0xff]
    %v861 = vld [vmem:[#allocation5 + $0x3d8] sm:$0xff]
    %v862 = vld [vmem:[#allocation5 + $0x3e0] sm:$0xff]
    %v863 = vld [vmem:[#allocation5 + $0x3e8] sm:$0xff]
    %v864 = vld [vmem:[#allocation5 + $0x3f0] sm:$0xff]
    %v865 = vld [vmem:[#allocation5 + $0x3f8] sm:$0xff]
    %v866 = vld [vmem:[#allocation5 + $0x400] sm:$0xff]
    %v867 = vld [vmem:[#allocation5 + $0x408] sm:$0xff]
    %v868 = vld [vmem:[#allocation5 + $0x410] sm:$0xff]
    %v869 = vld [vmem:[#allocation5 + $0x418] sm:$0xff]
    %v870 = vld [vmem:[#allocation5 + $0x420] sm:$0xff]
    %v871 = vld [vmem:[#allocation5 + $0x428] sm:$0xff]
    %v872 = vld [vmem:[#allocation5 + $0x430] sm:$0xff]
    %v873 = vld [vmem:[#allocation5 + $0x438] sm:$0xff]
    %v874 = vld [vmem:[#allocation5 + $0x440] sm:$0xff]
    %v875 = vld [vmem:[#allocation5 + $0x448] sm:$0xff]
    %v876 = vld [vmem:[#allocation5 + $0x450] sm:$0xff]
    %v877 = vld [vmem:[#allocation5 + $0x458] sm:$0xff]
    %v878 = vld [vmem:[#allocation5 + $0x460] sm:$0xff]
    %v879 = vld [vmem:[#allocation5 + $0x468] sm:$0xff]
    %v880 = vld [vmem:[#allocation5 + $0x470] sm:$0xff]
    %v881 = vld [vmem:[#allocation5 + $0x478] sm:$0xff]
    %v882 = vld [vmem:[#allocation5 + $0x480] sm:$0xff]
    %v883 = vld [vmem:[#allocation5 + $0x488] sm:$0xff]
    %v884 = vld [vmem:[#allocation5 + $0x490] sm:$0xff]
    %v885 = vld [vmem:[#allocation5 + $0x498] sm:$0xff]
    %v886 = vld [vmem:[#allocation5 + $0x4a0] sm:$0xff]
    %v887 = vld [vmem:[#allocation5 + $0x4a8] sm:$0xff]
    %888 = vmatprep.subr.mxu0 %v841
    %889 = vmatpush1.msra.mxu0 %v840
    %890 = vmatprep.subr.mxu0 %v844
    %891 = vmatpush1.msra.mxu0 %v843
    %892 = vmatprep.subr.mxu0 %v847
    %893 = vmatpush1.msra.mxu0 %v846
    %894 = vmatprep.subr.mxu0 %v850
    %895 = vmatpush1.msra.mxu0 %v849
    %896 = vmatprep.subr.mxu0 %v853
    %897 = vmatpush1.msra.mxu0 %v852
    %898 = vmatprep.subr.mxu0 %v856
    %899 = vmatpush1.msra.mxu0 %v855
    %900 = vmatprep.subr.mxu0 %v859
    %901 = vmatpush1.msra.mxu0 %v858
    %902 = vmatprep.subr.mxu0 %v862
    %903 = vmatpush1.msra.mxu0 %v861
    %904 = vmatprep.subr.mxu0 %v865
    %905 = vmatpush1.msra.mxu0 %v864
    %906 = vmatprep.subr.mxu0 %v868
    %907 = vmatpush1.msra.mxu0 %v867
    %908 = vmatprep.subr.mxu0 %v871
    %909 = vmatpush1.msra.mxu0 %v870
    %910 = vmatprep.subr.mxu0 %v874
    %911 = vmatpush1.msra.mxu0 %v873
    %912 = vmatprep.subr.mxu0 %v877
    %913 = vmatpush1.msra.mxu0 %v876
    %914 = vmatprep.subr.mxu0 %v880
    %915 = vmatpush1.msra.mxu0 %v879
    %916 = vmatprep.subr.mxu0 %v883
    %917 = vmatpush1.msra.mxu0 %v882
    %918 = vmatprep.subr.mxu0 %v886
    %919 = vmatpush1.msra.mxu0 %v885
    %920 = vmatprep.subr.mxu0 0.0
    %921 = vmatpush1.msra.mxu0 0.0
    %922 = vmatprep.subr.mxu0 0.0
    %923 = vmatpush1.msra.mxu0 0.0
    %924 = vmatprep.subr.mxu0 0.0
    %925 = vmatpush1.msra.mxu0 0.0
    %926 = vmatprep.subr.mxu0 0.0
    %927 = vmatpush1.msra.mxu0 0.0
    %928 = vmatprep.subr.mxu0 0.0
    %929 = vmatpush1.msra.mxu0 0.0
    %930 = vmatprep.subr.mxu0 0.0
    %931 = vmatpush1.msra.mxu0 0.0
    %932 = vmatprep.subr.mxu0 0.0
    %933 = vmatpush1.msra.mxu0 0.0
    %934 = vmatprep.subr.mxu0 0.0
    %935 = vmatpush1.msra.mxu0 0.0
    %936 = vmatprep.subr.mxu0 0.0
    %937 = vmatpush1.msra.mxu0 0.0
    %938 = vmatprep.subr.mxu0 0.0
    %939 = vmatpush1.msra.mxu0 0.0
    %940 = vmatprep.subr.mxu0 0.0
    %941 = vmatpush1.msra.mxu0 0.0
    %942 = vmatprep.subr.mxu0 0.0
    %943 = vmatpush1.msra.mxu0 0.0
    %944 = vmatprep.subr.mxu0 0.0
    %945 = vmatpush1.msra.mxu0 0.0
    %946 = vmatprep.subr.mxu0 0.0
    %947 = vmatpush1.msra.mxu0 0.0
    %948 = vmatprep.subr.mxu0 0.0
    %949 = vmatpush1.msra.mxu0 0.0
    %950 = vmatprep.subr.mxu0 0.0
    %951 = vmatpush1.msra.mxu0 0.0
    %952 = vmatprep.mubr.f32.mxu0 0.0
    %953 = vmatmul.mubr.f32.gmra.mrb[0].mxu0 %v838
    %v954 = vpop.f32.mrb[0].mxu0
    %v955 = vadd.f32 0.0, %v954
    %v956 = vpop.f32.mrb[0].mxu0
    %v957 = vadd.f32 0.0, %v956
    %958 = vmatprep.mubr.f32.mxu0 0.0
    %959 = vmatmul.mubr.f32.gmra.mrb[0].mxu0 %v839
    %v960 = vpop.f32.mrb[0].mxu0
    %v961 = vadd.f32 0.0, %v960
    %v962 = vpop.f32.mrb[0].mxu0
    %v963 = vadd.f32 0.0, %v962
    %964 = vdwg.mxu0
    %965 = vmatprep.subr.mxu0 0.0
    %966 = vmatpush1.msra.mxu0 %v842
    %967 = vmatprep.subr.mxu0 0.0
    %968 = vmatpush1.msra.mxu0 %v845
    %969 = vmatprep.subr.mxu0 0.0
    %970 = vmatpush1.msra.mxu0 %v848
    %971 = vmatprep.subr.mxu0 0.0
    %972 = vmatpush1.msra.mxu0 %v851
    %973 = vmatprep.subr.mxu0 0.0
    %974 = vmatpush1.msra.mxu0 %v854
    %975 = vmatprep.subr.mxu0 0.0
    %976 = vmatpush1.msra.mxu0 %v857
    %977 = vmatprep.subr.mxu0 0.0
    %978 = vmatpush1.msra.mxu0 %v860
    %979 = vmatprep.subr.mxu0 0.0
    %980 = vmatpush1.msra.mxu0 %v863
    %981 = vmatprep.subr.mxu0 0.0
    %982 = vmatpush1.msra.mxu0 %v866
    %983 = vmatprep.subr.mxu0 0.0
    %984 = vmatpush1.msra.mxu0 %v869
    %985 = vmatprep.subr.mxu0 0.0
    %986 = vmatpush1.msra.mxu0 %v872
    %987 = vmatprep.subr.mxu0 0.0
    %988 = vmatpush1.msra.mxu0 %v875
    %989 = vmatprep.subr.mxu0 0.0
    %990 = vmatpush1.msra.mxu0 %v878
    %991 = vmatprep.subr.mxu0 0.0
    %992 = vmatpush1.msra.mxu0 %v881
    %993 = vmatprep.subr.mxu0 0.0
    %994 = vmatpush1.msra.mxu0 %v884
    %995 = vmatprep.subr.mxu0 0.0
    %996 = vmatpush1.msra.mxu0 %v887
    %997 = vmatprep.subr.mxu0 0.0
    %998 = vmatpush1.msra.mxu0 0.0
    %999 = vmatprep.subr.mxu0 0.0
    %1000 = vmatpush1.msra.mxu0 0.0
    %1001 = vmatprep.subr.mxu0 0.0
    %1002 = vmatpush1.msra.mxu0 0.0
    %1003 = vmatprep.subr.mxu0 0.0
    %1004 = vmatpush1.msra.mxu0 0.0
    %1005 = vmatprep.subr.mxu0 0.0
    %1006 = vmatpush1.msra.mxu0 0.0
    %1007 = vmatprep.subr.mxu0 0.0
    %1008 = vmatpush1.msra.mxu0 0.0
    %1009 = vmatprep.subr.mxu0 0.0
    %1010 = vmatpush1.msra.mxu0 0.0
    %1011 = vmatprep.subr.mxu0 0.0
    %1012 = vmatpush1.msra.mxu0 0.0
    %1013 = vmatprep.subr.mxu0 0.0
    %1014 = vmatpush1.msra.mxu0 0.0
    %1015 = vmatprep.subr.mxu0 0.0
    %1016 = vmatpush1.msra.mxu0 0.0
    %1017 = vmatprep.subr.mxu0 0.0
    %1018 = vmatpush1.msra.mxu0 0.0
    %1019 = vmatprep.subr.mxu0 0.0
    %1020 = vmatpush1.msra.mxu0 0.0
    %1021 = vmatprep.subr.mxu0 0.0
    %1022 = vmatpush1.msra.mxu0 0.0
    %1023 = vmatprep.subr.mxu0 0.0
    %1024 = vmatpush1.msra.mxu0 0.0
    %1025 = vmatprep.subr.mxu0 0.0
    %1026 = vmatpush1.msra.mxu0 0.0
    %1027 = vmatprep.subr.mxu0 0.0
    %1028 = vmatpush1.msra.mxu0 0.0
    %1029 = vmatprep.mubr.f32.mxu0 0.0
    %1030 = vmatmul.mubr.f32.gmra.mrb[0].mxu0 %v838
    %v1031 = vpop.f32.mrb[0].mxu0
    %v1032 = vadd.f32 0.0, %v1031
    %v1033 = vpop.f32.mrb[0].mxu0
    %1034 = vmatprep.mubr.f32.mxu0 0.0
    %1035 = vmatmul.mubr.f32.gmra.mrb[0].mxu0 %v839
    %v1036 = vpop.f32.mrb[0].mxu0
    %v1037 = vadd.f32 0.0, %v1036
    %v1038 = vpop.f32.mrb[0].mxu0
    %1039 = vdwg.mxu0
    %v1041 = vrot.slane %v1032, 1
    %v1043 = vsel %vm601, %v1041, 0.0
    %v1044 = vadd.f32 %v955, %v1043
    %v1046 = vrot.slane %v1044, 7
    %v1049 = vrot.slane %v957, 7
    %v1051 = vrot.slane %v1044, 6
    %v1053 = vrot.slane %v957, 6
    %v1055 = vrot.slane %v1044, 5
    %v1057 = vrot.slane %v957, 5
    %v1059 = vrot.slane %v1044, 4
    %v1061 = vrot.slane %v957, 4
    %v1063 = vrot.slane %v1044, 3
    %v1065 = vrot.slane %v957, 3
    %v1067 = vrot.slane %v1044, 2
    %v1069 = vrot.slane %v957, 2
    %v1071 = vrot.slane %v1044, 1
    %v1073 = vsel %vm343, %v957, %v1046
    %v1074 = vsel %vm345, %v1073, %v1049
    %v1075 = vsel %vm347, %v1074, %v1051
    %v1076 = vsel %vm99, %v1075, %v1053
    %v1077 = vsel %vm350, %v1076, %v1055
    %v1078 = vsel %vm601, %v1077, %v1057
    %v1079 = vsel %vm631, %v1078, %v1059
    %v1080 = vsel %vm343, %v1061, %v1063
    %v1081 = vsel %vm345, %v1080, %v1065
    %v1082 = vsel %vm347, %v1081, %v1067
    %v1083 = vsel %vm99, %v1082, %v1069
    %v1084 = vsel %vm350, %v1083, %v1071
    %v1085 = vsel %vm601, %v1037, 0.0
    %v1087 = vrot.slane %v1085, 1
    %v1089 = vadd.f32 %v955, %v1087
    %v1090 = vadd.f32 %v961, %v1087
    %v1092 = vrot.slane %v1089, 6
    %v1095 = vrot.slane %v963, 6
    %v1098 = vrot.slane %v1090, 5
    %v1100 = vrot.slane %v963, 5
    %v1102 = vrot.slane %v1090, 4
    %v1104 = vrot.slane %v963, 4
    %v1106 = vrot.slane %v1090, 3
    %v1108 = vrot.slane %v963, 3
    %v1110 = vrot.slane %v1090, 2
    %v1112 = vrot.slane %v963, 2
    %v1114 = vrot.slane %v1090, 1
    %v1116 = vrot.slane %v963, 1
    %v1118 = vsel %vm343, %v1049, %v1092
    %v1119 = vsel %vm345, %v1118, %v1095
    %v1120 = vsel %vm347, %v1119, %v1098
    %v1121 = vsel %vm99, %v1120, %v1100
    %v1122 = vsel %vm350, %v1121, %v1102
    %v1123 = vsel %vm601, %v1122, %v1104
    %v1124 = vsel %vm631, %v1123, %v1106
    %v1125 = vsel %vm343, %v1108, %v1110
    %v1126 = vsel %vm345, %v1125, %v1112
    %v1127 = vsel %vm347, %v1126, %v1114
    %v1128 = vsel %vm99, %v1127, %v1116
    %v1129 = vsel %vm350, %v1128, %v1090
    %v1132 = vrot.slane %v1124, 2
    %v1133 = vrot.slane %v1129, 2
    %v1134 = vsel %vm601, %v1132, %v1133
    %v1138 = vsel %vm601, %v1084, %v1132
    %v1139 = vlaneseq
    %v1140 = vshrl.u32 %v1139, 7
    %v1141 = vsub.s32 2, %v1140
    %v1142 = vrot.slane %v38, %v1141
    %v1143 = vadd.f32 %v1079, %v1142
    %v1144 = vadd.f32 %v1138, %v1142
    %v1145 = vadd.f32 %v1134, %v1142
    %v1146 = vadd.f32 %v1133, %v1142
    %v1147 = vadd.f32 %v1143, %v1144
    %v1148 = vadd.f32 %v1147, %v1145
    %v1149 = vsel %vm99, %v1146, 0.0
    %v1150 = vadd.f32 %v1148, %v1149
    %v1151 = vrot.slane %v1150, 4
    %v1152 = vadd.f32 %v1150, %v1151
    %v1153 = vrot.slane %v1152, 2
    %v1154 = vadd.f32 %v1152, %v1153
    %v1155 = vrot.slane %v1154, 1
    %v1156 = vadd.f32 %v1154, %v1155
    %v1157 = vmul.f32 %v1143, %v1143
    %v1158 = vmul.f32 %v1144, %v1144
    %v1159 = vmul.f32 %v1145, %v1145
    %v1160 = vmul.f32 %v1146, %v1146
    %v1161 = vadd.f32 %v1157, %v1158
    %v1162 = vadd.f32 %v1161, %v1159
    %v1163 = vsel %vm99, %v1160, 0.0
    %v1164 = vadd.f32 %v1162, %v1163
    %v1165 = vrot.slane %v1164, 4
    %v1166 = vadd.f32 %v1164, %v1165
    %v1167 = vrot.slane %v1166, 2
    %v1168 = vadd.f32 %v1166, %v1167
    %v1169 = vrot.slane %v1168, 1
    %v1170 = vadd.f32 %v1168, %v1169
    %v1171 = vsel %vm343, %v1156, %v1170
    %1172 = vmatprep.subr.mxu0 0.0
    %1173 = vmatpush1.msra.mxu0 %v368
    %1174 = vmatprep.subr.mxu0 0.0
    %1175 = vmatpush1.msra.mxu0 %v369
    %1176 = vmatprep.subr.mxu0 0.0
    %1177 = vmatpush1.msra.mxu0 %v370
    %1178 = vmatprep.subr.mxu0 0.0
    %1179 = vmatpush1.msra.mxu0 %v371
    %1180 = vmatprep.subr.mxu0 0.0
    %1181 = vmatpush1.msra.mxu0 %v372
    %1182 = vmatprep.subr.mxu0 0.0
    %1183 = vmatpush1.msra.mxu0 %v373
    %1184 = vmatprep.subr.mxu0 0.0
    %1185 = vmatpush1.msra.mxu0 %v374
    %1186 = vmatprep.subr.mxu0 0.0
    %1187 = vmatpush1.msra.mxu0 %v375
    %1188 = vmatprep.subr.mxu0 0.0
    %1189 = vmatpush1.msra.mxu0 %v376
    %1190 = vmatprep.subr.mxu0 0.0
    %1191 = vmatpush1.msra.mxu0 %v377
    %1192 = vmatprep.subr.mxu0 0.0
    %1193 = vmatpush1.msra.mxu0 %v378
    %1194 = vmatprep.subr.mxu0 0.0
    %1195 = vmatpush1.msra.mxu0 %v379
    %1196 = vmatprep.subr.mxu0 0.0
    %1197 = vmatpush1.msra.mxu0 %v380
    %1198 = vmatprep.subr.mxu0 0.0
    %1199 = vmatpush1.msra.mxu0 %v381
    %1200 = vmatprep.subr.mxu0 0.0
    %1201 = vmatpush1.msra.mxu0 %v382
    %1202 = vmatprep.subr.mxu0 0.0
    %1203 = vmatpush1.msra.mxu0 %v383
    %1204 = vmatprep.subr.mxu0 0.0
    %1205 = vmatpush1.msra.mxu0 0.0
    %1206 = vmatprep.subr.mxu0 0.0
    %1207 = vmatpush1.msra.mxu0 0.0
    %1208 = vmatprep.subr.mxu0 0.0
    %1209 = vmatpush1.msra.mxu0 0.0
    %1210 = vmatprep.subr.mxu0 0.0
    %1211 = vmatpush1.msra.mxu0 0.0
    %1212 = vmatprep.subr.mxu0 0.0
    %1213 = vmatpush1.msra.mxu0 0.0
    %1214 = vmatprep.subr.mxu0 0.0
    %1215 = vmatpush1.msra.mxu0 0.0
    %1216 = vmatprep.subr.mxu0 0.0
    %1217 = vmatpush1.msra.mxu0 0.0
    %1218 = vmatprep.subr.mxu0 0.0
    %1219 = vmatpush1.msra.mxu0 0.0
    %1220 = vmatprep.subr.mxu0 0.0
    %1221 = vmatpush1.msra.mxu0 0.0
    %1222 = vmatprep.subr.mxu0 0.0
    %1223 = vmatpush1.msra.mxu0 0.0
    %1224 = vmatprep.subr.mxu0 0.0
    %1225 = vmatpush1.msra.mxu0 0.0
    %1226 = vmatprep.subr.mxu0 0.0
    %1227 = vmatpush1.msra.mxu0 0.0
    %1228 = vmatprep.subr.mxu0 0.0
    %1229 = vmatpush1.msra.mxu0 0.0
    %1230 = vmatprep.subr.mxu0 0.0
    %1231 = vmatpush1.msra.mxu0 0.0
    %1232 = vmatprep.subr.mxu0 0.0
    %1233 = vmatpush1.msra.mxu0 0.0
    %1234 = vmatprep.subr.mxu0 0.0
    %1235 = vmatpush1.msra.mxu0 0.0
    %1236 = vmatprep.mubr.f32.mxu0 0.0
    %1237 = vmatmul.mubr.f32.gmra.mrb[0].mxu0 %v1171
    %v1238 = vpop.f32.mrb[0].mxu0
    %v1239 = vadd.f32 0.0, %v1238
    %v1240 = vpop.f32.mrb[0].mxu0
    %1241 = vdwg.mxu0
    %v1242 = vmul.f32 %v1239, 0.0025510204
    %v1243 = vmul.f32 %v1242, %v1242
    %v1245 = vrot.slane %v1243, 7
    %v1247 = vsub.f32 %v1242, %v1245
    %v1248 = vmax.f32 %v1247, 0.0
    %v1249 = vadd.f32 %v1248, 1e-05
    %v1250 = vrsqrt.pop %v1249
    %v1251 = vsub.f32 0.0, %v1242
    %v1253 = vrot.slane %v1250, 1
    %v1255 = vmul.f32 %v1251, %v1253
    %v1257 = vrot.slane %v1255, 7
    %v1259 = vsel %vm343, %v1253, %v1257
    %vm1260 = vcmask 64512
    %v1262 = vsel %vm1260, %v1259, 0
    %1264 = vmatprep.subr.mxu0 0.0
    %1265 = vmatpush1.msra.mxu0 %v386
    %1266 = vmatprep.subr.mxu0 0.0
    %1267 = vmatpush1.msra.mxu0 0.0
    %1268 = vmatprep.subr.mxu0 0.0
    %1269 = vmatpush1.msra.mxu0 0.0
    %1270 = vmatprep.subr.mxu0 0.0
    %1271 = vmatpush1.msra.mxu0 0.0
    %1272 = vmatprep.subr.mxu0 0.0
    %1273 = vmatpush1.msra.mxu0 0.0
    %1274 = vmatprep.subr.mxu0 0.0
    %1275 = vmatpush1.msra.mxu0 0.0
    %1276 = vmatprep.subr.mxu0 0.0
    %1277 = vmatpush1.msra.mxu0 0.0
    %1278 = vmatprep.subr.mxu0 0.0
    %1279 = vmatpush1.msra.mxu0 0.0
    %1280 = vmatprep.subr.mxu0 0.0
    %1281 = vmatpush1.msra.mxu0 0.0
    %1282 = vmatprep.subr.mxu0 0.0
    %1283 = vmatpush1.msra.mxu0 0.0
    %1284 = vmatprep.subr.mxu0 0.0
    %1285 = vmatpush1.msra.mxu0 0.0
    %1286 = vmatprep.subr.mxu0 0.0
    %1287 = vmatpush1.msra.mxu0 0.0
    %1288 = vmatprep.subr.mxu0 0.0
    %1289 = vmatpush1.msra.mxu0 0.0
    %1290 = vmatprep.subr.mxu0 0.0
    %1291 = vmatpush1.msra.mxu0 0.0
    %1292 = vmatprep.subr.mxu0 0.0
    %1293 = vmatpush1.msra.mxu0 0.0
    %1294 = vmatprep.subr.mxu0 0.0
    %1295 = vmatpush1.msra.mxu0 0.0
    %1296 = vmatprep.subr.mxu0 0.0
    %1297 = vmatpush1.msra.mxu0 0.0
    %1298 = vmatprep.subr.mxu0 0.0
    %1299 = vmatpush1.msra.mxu0 0.0
    %1300 = vmatprep.subr.mxu0 0.0
    %1301 = vmatpush1.msra.mxu0 0.0
    %1302 = vmatprep.subr.mxu0 0.0
    %1303 = vmatpush1.msra.mxu0 0.0
    %1304 = vmatprep.subr.mxu0 0.0
    %1305 = vmatpush1.msra.mxu0 0.0
    %1306 = vmatprep.subr.mxu0 0.0
    %1307 = vmatpush1.msra.mxu0 0.0
    %1308 = vmatprep.subr.mxu0 0.0
    %1309 = vmatpush1.msra.mxu0 0.0
    %1310 = vmatprep.subr.mxu0 0.0
    %1311 = vmatpush1.msra.mxu0 0.0
    %1312 = vmatprep.subr.mxu0 0.0
    %1313 = vmatpush1.msra.mxu0 0.0
    %1314 = vmatprep.subr.mxu0 0.0
    %1315 = vmatpush1.msra.mxu0 0.0
    %1316 = vmatprep.subr.mxu0 0.0
    %1317 = vmatpush1.msra.mxu0 0.0
    %1318 = vmatprep.subr.mxu0 0.0
    %1319 = vmatpush1.msra.mxu0 0.0
    %1320 = vmatprep.subr.mxu0 0.0
    %1321 = vmatpush1.msra.mxu0 0.0
    %1322 = vmatprep.subr.mxu0 0.0
    %1323 = vmatpush1.msra.mxu0 0.0
    %1324 = vmatprep.subr.mxu0 0.0
    %1325 = vmatpush1.msra.mxu0 0.0
    %1326 = vmatprep.subr.mxu0 0.0
    %1327 = vmatpush1.msra.mxu0 0.0
    %1328 = vmatprep.mubr.f32.mxu0 0.0
    %1329 = vmatmul.mubr.f32.gmra.mrb[0].mxu0 %v1262
    %v1330 = vpop.f32.mrb[0].mxu0
    %v1331 = vadd.f32 0.0, %v1330
    %v1332 = vpop.f32.mrb[0].mxu0
    %1333 = vdwg.mxu0
    %v1334 = vlaneseq
    %v1335 = vshrl.u32 %v1334, 7
    %v1336 = vsub.s32 0, %v1335
    %v1337 = vrot.slane %v1331, %v1336
    %v1338 = vmul.f32 %v1143, %v1337
    %v1339 = vmul.f32 %v1144, %v1337
    %v1340 = vmul.f32 %v1145, %v1337
    %v1341 = vmul.f32 %v1146, %v1337
    %v1342 = vlaneseq
    %v1343 = vshrl.u32 %v1342, 7
    %v1344 = vsub.s32 1, %v1343
    %v1345 = vrot.slane %v1331, %v1344
    %v1346 = vadd.f32 %v1338, %v1345
    %v1347 = vadd.f32 %v1339, %v1345
    %v1348 = vadd.f32 %v1340, %v1345
    %v1349 = vadd.f32 %v1341, %v1345
    %v1350 = vlaneseq
    %v1351 = vshrl.u32 %v1350, 7
    %v1352 = vsub.s32 5, %v1351
    %v1353 = vrot.slane %v38, %v1352
    %v1354 = vadd.f32 %v1346, %v1353
    %v1355 = vadd.f32 %v1347, %v1353
    %v1356 = vadd.f32 %v1348, %v1353
    %v1357 = vadd.f32 %v1349, %v1353
    %v1358 = vmax.f32 %v1354, 0.0
    %v1359 = vmax.f32 %v1355, 0.0
    %v1360 = vmax.f32 %v1356, 0.0
    %v1361 = vmax.f32 %v1357, 0.0
    %v1362 = vld [vmem:[#allocation5 + $0x4b0] sm:$0xff]
    %v1363 = vld [vmem:[#allocation5 + $0x4b8] sm:$0xff]
    %v1364 = vld [vmem:[#allocation5 + $0x4c0] sm:$0xff]
    %v1365 = vld [vmem:[#allocation5 + $0x4c8] sm:$0xff]
    %v1366 = vld [vmem:[#allocation5 + $0x4d0] sm:$0xff]
    %v1367 = vld [vmem:[#allocation5 + $0x4d8] sm:$0xff]
    %v1368 = vld [vmem:[#allocation5 + $0x4e0] sm:$0xff]
    %v1369 = vld [vmem:[#allocation5 + $0x4e8] sm:$0xff]
    %v1370 = vld [vmem:[#allocation5 + $0x4f0] sm:$0xff]
    %v1371 = vld [vmem:[#allocation5 + $0x4f8] sm:$0xff]
    %v1372 = vld [vmem:[#allocation5 + $0x500] sm:$0xff]
    %v1373 = vld [vmem:[#allocation5 + $0x508] sm:$0xff]
    %v1374 = vld [vmem:[#allocation5 + $0x510] sm:$0xff]
    %v1375 = vld [vmem:[#allocation5 + $0x518] sm:$0xff]
    %v1376 = vld [vmem:[#allocation5 + $0x520] sm:$0xff]
    %v1377 = vld [vmem:[#allocation5 + $0x528] sm:$0xff]
    %v1378 = vld [vmem:[#allocation5 + $0x530] sm:$0xff]
    %v1379 = vld [vmem:[#allocation5 + $0x538] sm:$0xff]
    %v1380 = vld [vmem:[#allocation5 + $0x540] sm:$0xff]
    %v1381 = vld [vmem:[#allocation5 + $0x548] sm:$0xff]
    %v1382 = vld [vmem:[#allocation5 + $0x550] sm:$0xff]
    %v1383 = vld [vmem:[#allocation5 + $0x558] sm:$0xff]
    %v1384 = vld [vmem:[#allocation5 + $0x560] sm:$0xff]
    %v1385 = vld [vmem:[#allocation5 + $0x568] sm:$0xff]
    %v1386 = vld [vmem:[#allocation5 + $0x570] sm:$0xff]
    %v1387 = vld [vmem:[#allocation5 + $0x578] sm:$0xff]
    %v1388 = vld [vmem:[#allocation5 + $0x580] sm:$0xff]
    %v1389 = vld [vmem:[#allocation5 + $0x588] sm:$0xff]
    %v1390 = vld [vmem:[#allocation5 + $0x590] sm:$0xff]
    %v1391 = vld [vmem:[#allocation5 + $0x598] sm:$0xff]
    %v1392 = vld [vmem:[#allocation5 + $0x5a0] sm:$0xff]
    %v1393 = vld [vmem:[#allocation5 + $0x5a8] sm:$0xff]
    %v1394 = vld [vmem:[#allocation5 + $0x5b0] sm:$0xff]
    %v1395 = vld [vmem:[#allocation5 + $0x5b8] sm:$0xff]
    %v1396 = vld [vmem:[#allocation5 + $0x5c0] sm:$0xff]
    %v1397 = vld [vmem:[#allocation5 + $0x5c8] sm:$0xff]
    %v1398 = vld [vmem:[#allocation5 + $0x5d0] sm:$0xff]
    %v1399 = vld [vmem:[#allocation5 + $0x5d8] sm:$0xff]
    %v1400 = vld [vmem:[#allocation5 + $0x5e0] sm:$0xff]
    %v1401 = vld [vmem:[#allocation5 + $0x5e8] sm:$0xff]
    %v1402 = vld [vmem:[#allocation5 + $0x5f0] sm:$0xff]
    %v1403 = vld [vmem:[#allocation5 + $0x5f8] sm:$0xff]
    %v1404 = vld [vmem:[#allocation5 + $0x600] sm:$0xff]
    %v1405 = vld [vmem:[#allocation5 + $0x608] sm:$0xff]
    %v1406 = vld [vmem:[#allocation5 + $0x610] sm:$0xff]
    %v1407 = vld [vmem:[#allocation5 + $0x618] sm:$0xff]
    %v1408 = vld [vmem:[#allocation5 + $0x620] sm:$0xff]
    %v1409 = vld [vmem:[#allocation5 + $0x628] sm:$0xff]
    %1410 = vmatprep.subr.mxu0 %v1363
    %1411 = vmatpush1.msra.mxu0 %v1362
    %1412 = vmatprep.subr.mxu0 %v1366
    %1413 = vmatpush1.msra.mxu0 %v1365
    %1414 = vmatprep.subr.mxu0 %v1369
    %1415 = vmatpush1.msra.mxu0 %v1368
    %1416 = vmatprep.subr.mxu0 %v1372
    %1417 = vmatpush1.msra.mxu0 %v1371
    %1418 = vmatprep.subr.mxu0 %v1375
    %1419 = vmatpush1.msra.mxu0 %v1374
    %1420 = vmatprep.subr.mxu0 %v1378
    %1421 = vmatpush1.msra.mxu0 %v1377
    %1422 = vmatprep.subr.mxu0 %v1381
    %1423 = vmatpush1.msra.mxu0 %v1380
    %1424 = vmatprep.subr.mxu0 %v1384
    %1425 = vmatpush1.msra.mxu0 %v1383
    %1426 = vmatprep.subr.mxu0 %v1387
    %1427 = vmatpush1.msra.mxu0 %v1386
    %1428 = vmatprep.subr.mxu0 %v1390
    %1429 = vmatpush1.msra.mxu0 %v1389
    %1430 = vmatprep.subr.mxu0 %v1393
    %1431 = vmatpush1.msra.mxu0 %v1392
    %1432 = vmatprep.subr.mxu0 %v1396
    %1433 = vmatpush1.msra.mxu0 %v1395
    %1434 = vmatprep.subr.mxu0 %v1399
    %1435 = vmatpush1.msra.mxu0 %v1398
    %1436 = vmatprep.subr.mxu0 %v1402
    %1437 = vmatpush1.msra.mxu0 %v1401
    %1438 = vmatprep.subr.mxu0 %v1405
    %1439 = vmatpush1.msra.mxu0 %v1404
    %1440 = vmatprep.subr.mxu0 %v1408
    %1441 = vmatpush1.msra.mxu0 %v1407
    %1442 = vmatprep.subr.mxu0 0.0
    %1443 = vmatpush1.msra.mxu0 0.0
    %1444 = vmatprep.subr.mxu0 0.0
    %1445 = vmatpush1.msra.mxu0 0.0
    %1446 = vmatprep.subr.mxu0 0.0
    %1447 = vmatpush1.msra.mxu0 0.0
    %1448 = vmatprep.subr.mxu0 0.0
    %1449 = vmatpush1.msra.mxu0 0.0
    %1450 = vmatprep.subr.mxu0 0.0
    %1451 = vmatpush1.msra.mxu0 0.0
    %1452 = vmatprep.subr.mxu0 0.0
    %1453 = vmatpush1.msra.mxu0 0.0
    %1454 = vmatprep.subr.mxu0 0.0
    %1455 = vmatpush1.msra.mxu0 0.0
    %1456 = vmatprep.subr.mxu0 0.0
    %1457 = vmatpush1.msra.mxu0 0.0
    %1458 = vmatprep.subr.mxu0 0.0
    %1459 = vmatpush1.msra.mxu0 0.0
    %1460 = vmatprep.subr.mxu0 0.0
    %1461 = vmatpush1.msra.mxu0 0.0
    %1462 = vmatprep.subr.mxu0 0.0
    %1463 = vmatpush1.msra.mxu0 0.0
    %1464 = vmatprep.subr.mxu0 0.0
    %1465 = vmatpush1.msra.mxu0 0.0
    %1466 = vmatprep.subr.mxu0 0.0
    %1467 = vmatpush1.msra.mxu0 0.0
    %1468 = vmatprep.subr.mxu0 0.0
    %1469 = vmatpush1.msra.mxu0 0.0
    %1470 = vmatprep.subr.mxu0 0.0
    %1471 = vmatpush1.msra.mxu0 0.0
    %1472 = vmatprep.subr.mxu0 0.0
    %1473 = vmatpush1.msra.mxu0 0.0
    %1474 = vmatprep.mubr.f32.mxu0 0.0
    %1475 = vmatmul.mubr.f32.gmra.mrb[0].mxu0 %v1358
    %v1476 = vpop.f32.mrb[0].mxu0
    %v1477 = vadd.f32 0.0, %v1476
    %v1478 = vpop.f32.mrb[0].mxu0
    %v1479 = vadd.f32 0.0, %v1478
    %1480 = vmatprep.mubr.f32.mxu0 0.0
    %1481 = vmatmul.mubr.f32.gmra.mrb[0].mxu0 %v1359
    %v1482 = vpop.f32.mrb[0].mxu0
    %v1483 = vadd.f32 0.0, %v1482
    %v1484 = vpop.f32.mrb[0].mxu0
    %v1485 = vadd.f32 0.0, %v1484
    %1486 = vmatprep.mubr.f32.mxu0 0.0
    %1487 = vmatmul.mubr.f32.gmra.mrb[0].mxu0 %v1360
    %v1488 = vpop.f32.mrb[0].mxu0
    %v1489 = vadd.f32 0.0, %v1488
    %v1490 = vpop.f32.mrb[0].mxu0
    %v1491 = vadd.f32 0.0, %v1490
    %1492 = vmatprep.mubr.f32.mxu0 0.0
    %1493 = vmatmul.mubr.f32.gmra.mrb[0].mxu0 %v1361
    %v1494 = vpop.f32.mrb[0].mxu0
    %v1495 = vadd.f32 0.0, %v1494
    %v1496 = vpop.f32.mrb[0].mxu0
    %v1497 = vadd.f32 0.0, %v1496
    %1498 = vdwg.mxu0
    %1499 = vmatprep.subr.mxu0 0.0
    %1500 = vmatpush1.msra.mxu0 %v1364
    %1501 = vmatprep.subr.mxu0 0.0
    %1502 = vmatpush1.msra.mxu0 %v1367
    %1503 = vmatprep.subr.mxu0 0.0
    %1504 = vmatpush1.msra.mxu0 %v1370
    %1505 = vmatprep.subr.mxu0 0.0
    %1506 = vmatpush1.msra.mxu0 %v1373
    %1507 = vmatprep.subr.mxu0 0.0
    %1508 = vmatpush1.msra.mxu0 %v1376
    %1509 = vmatprep.subr.mxu0 0.0
    %1510 = vmatpush1.msra.mxu0 %v1379
    %1511 = vmatprep.subr.mxu0 0.0
    %1512 = vmatpush1.msra.mxu0 %v1382
    %1513 = vmatprep.subr.mxu0 0.0
    %1514 = vmatpush1.msra.mxu0 %v1385
    %1515 = vmatprep.subr.mxu0 0.0
    %1516 = vmatpush1.msra.mxu0 %v1388
    %1517 = vmatprep.subr.mxu0 0.0
    %1518 = vmatpush1.msra.mxu0 %v1391
    %1519 = vmatprep.subr.mxu0 0.0
    %1520 = vmatpush1.msra.mxu0 %v1394
    %1521 = vmatprep.subr.mxu0 0.0
    %1522 = vmatpush1.msra.mxu0 %v1397
    %1523 = vmatprep.subr.mxu0 0.0
    %1524 = vmatpush1.msra.mxu0 %v1400
    %1525 = vmatprep.subr.mxu0 0.0
    %1526 = vmatpush1.msra.mxu0 %v1403
    %1527 = vmatprep.subr.mxu0 0.0
    %1528 = vmatpush1.msra.mxu0 %v1406
    %1529 = vmatprep.subr.mxu0 0.0
    %1530 = vmatpush1.msra.mxu0 %v1409
    %1531 = vmatprep.subr.mxu0 0.0
    %1532 = vmatpush1.msra.mxu0 0.0
    %1533 = vmatprep.subr.mxu0 0.0
    %1534 = vmatpush1.msra.mxu0 0.0
    %1535 = vmatprep.subr.mxu0 0.0
    %1536 = vmatpush1.msra.mxu0 0.0
    %1537 = vmatprep.subr.mxu0 0.0
    %1538 = vmatpush1.msra.mxu0 0.0
    %1539 = vmatprep.subr.mxu0 0.0
    %1540 = vmatpush1.msra.mxu0 0.0
    %1541 = vmatprep.subr.mxu0 0.0
    %1542 = vmatpush1.msra.mxu0 0.0
    %1543 = vmatprep.subr.mxu0 0.0
    %1544 = vmatpush1.msra.mxu0 0.0
    %1545 = vmatprep.subr.mxu0 0.0
    %1546 = vmatpush1.msra.mxu0 0.0
    %1547 = vmatprep.subr.mxu0 0.0
    %1548 = vmatpush1.msra.mxu0 0.0
    %1549 = vmatprep.subr.mxu0 0.0
    %1550 = vmatpush1.msra.mxu0 0.0
    %1551 = vmatprep.subr.mxu0 0.0
    %1552 = vmatpush1.msra.mxu0 0.0
    %1553 = vmatprep.subr.mxu0 0.0
    %1554 = vmatpush1.msra.mxu0 0.0
    %1555 = vmatprep.subr.mxu0 0.0
    %1556 = vmatpush1.msra.mxu0 0.0
    %1557 = vmatprep.subr.mxu0 0.0
    %1558 = vmatpush1.msra.mxu0 0.0
    %1559 = vmatprep.subr.mxu0 0.0
    %1560 = vmatpush1.msra.mxu0 0.0
    %1561 = vmatprep.subr.mxu0 0.0
    %1562 = vmatpush1.msra.mxu0 0.0
    %1563 = vmatprep.mubr.f32.mxu0 0.0
    %1564 = vmatmul.mubr.f32.gmra.mrb[0].mxu0 %v1358
    %v1565 = vpop.f32.mrb[0].mxu0
    %v1566 = vadd.f32 0.0, %v1565
    %v1567 = vpop.f32.mrb[0].mxu0
    %1568 = vmatprep.mubr.f32.mxu0 0.0
    %1569 = vmatmul.mubr.f32.gmra.mrb[0].mxu0 %v1359
    %v1570 = vpop.f32.mrb[0].mxu0
    %v1571 = vadd.f32 0.0, %v1570
    %v1572 = vpop.f32.mrb[0].mxu0
    %1573 = vmatprep.mubr.f32.mxu0 0.0
    %1574 = vmatmul.mubr.f32.gmra.mrb[0].mxu0 %v1360
    %v1575 = vpop.f32.mrb[0].mxu0
    %v1576 = vadd.f32 0.0, %v1575
    %v1577 = vpop.f32.mrb[0].mxu0
    %1578 = vmatprep.mubr.f32.mxu0 0.0
    %1579 = vmatmul.mubr.f32.gmra.mrb[0].mxu0 %v1361
    %v1580 = vpop.f32.mrb[0].mxu0
    %v1581 = vadd.f32 0.0, %v1580
    %v1582 = vpop.f32.mrb[0].mxu0
    %1583 = vdwg.mxu0
    %v1586 = vrot.slane %v1566, 1
    %v1587 = vrot.slane %v1571, 1
    %v1588 = vsel %vm631, %v1586, %v1587
    %v1591 = vsel %vm350, %v1587, 0.0
    %v1592 = vadd.f32 %v1477, %v1588
    %v1593 = vadd.f32 %v1483, %v1591
    %v1595 = vrot.slane %v1592, 7
    %v1598 = vrot.slane %v1479, 7
    %v1600 = vrot.slane %v1592, 6
    %v1602 = vrot.slane %v1479, 6
    %v1604 = vrot.slane %v1592, 5
    %v1606 = vrot.slane %v1479, 5
    %v1608 = vrot.slane %v1592, 4
    %v1610 = vrot.slane %v1479, 4
    %v1612 = vrot.slane %v1592, 3
    %v1614 = vrot.slane %v1479, 3
    %v1616 = vrot.slane %v1592, 2
    %v1618 = vrot.slane %v1479, 2
    %v1620 = vrot.slane %v1592, 1
    %v1622 = vrot.slane %v1479, 1
    %v1624 = vsel %vm343, %v1479, %v1595
    %v1625 = vsel %vm345, %v1624, %v1598
    %v1626 = vsel %vm347, %v1625, %v1600
    %v1627 = vsel %vm99, %v1626, %v1602
    %v1628 = vsel %vm350, %v1627, %v1604
    %v1629 = vsel %vm601, %v1628, %v1606
    %v1630 = vsel %vm631, %v1629, %v1608
    %v1631 = vsel %vm343, %v1610, %v1612
    %v1632 = vsel %vm345, %v1631, %v1614
    %v1633 = vsel %vm347, %v1632, %v1616
    %v1634 = vsel %vm99, %v1633, %v1618
    %v1635 = vsel %vm350, %v1634, %v1620
    %v1636 = vsel %vm601, %v1635, %v1622
    %v1637 = vsel %vm631, %v1636, %v1592
    %v1639 = vrot.slane %v1593, 7
    %v1642 = vrot.slane %v1485, 7
    %v1644 = vrot.slane %v1593, 6
    %v1646 = vrot.slane %v1485, 6
    %v1648 = vrot.slane %v1593, 5
    %v1650 = vrot.slane %v1485, 5
    %v1652 = vrot.slane %v1593, 4
    %v1654 = vrot.slane %v1485, 4
    %v1656 = vrot.slane %v1593, 3
    %v1658 = vrot.slane %v1485, 3
    %v1660 = vrot.slane %v1593, 2
    %v1662 = vsel %vm343, %v1485, %v1639
    %v1663 = vsel %vm345, %v1662, %v1642
    %v1664 = vsel %vm347, %v1663, %v1644
    %v1665 = vsel %vm99, %v1664, %v1646
    %v1666 = vsel %vm350, %v1665, %v1648
    %v1667 = vsel %vm601, %v1666, %v1650
    %v1668 = vsel %vm631, %v1667, %v1652
    %v1669 = vsel %vm343, %v1654, %v1656
    %v1670 = vsel %vm345, %v1669, %v1658
    %v1671 = vsel %vm347, %v1670, %v1660
    %v1674 = vrot.slane %v1571, 7
    %v1675 = vrot.slane %v1576, 7
    %v1676 = vsel %vm343, %v1674, %v1675
    %v1677 = vrot.slane %v1581, 7
    %v1678 = vsel %vm343, %v1675, %v1677
    %v1680 = vsel %vm350, %v1678, 0.0
    %v1682 = vrot.slane %v1676, 2
    %v1683 = vrot.slane %v1680, 2
    %v1684 = vsel %vm601, %v1682, %v1683
    %v1688 = vadd.f32 %v1483, %v1682
    %v1689 = vadd.f32 %v1489, %v1684
    %v1690 = vadd.f32 %v1495, %v1683
    %v1692 = vrot.slane %v1688, 5
    %v1694 = vrot.slane %v1688, 4
    %v1697 = vrot.slane %v1491, 4
    %v1700 = vrot.slane %v1689, 3
    %v1702 = vrot.slane %v1491, 3
    %v1704 = vrot.slane %v1689, 2
    %v1706 = vrot.slane %v1491, 2
    %v1708 = vrot.slane %v1689, 1
    %v1710 = vrot.slane %v1491, 1
    %v1712 = vrot.slane %v1689, 7
    %v1714 = vrot.slane %v1491, 7
    %v1716 = vrot.slane %v1689, 6
    %v1718 = vsel %vm343, %v1646, %v1692
    %v1719 = vsel %vm345, %v1718, %v1650
    %v1720 = vsel %vm347, %v1719, %v1694
    %v1721 = vsel %vm99, %v1720, %v1697
    %v1722 = vsel %vm350, %v1721, %v1700
    %v1723 = vsel %vm601, %v1722, %v1702
    %v1724 = vsel %vm631, %v1723, %v1704
    %v1725 = vsel %vm343, %v1706, %v1708
    %v1726 = vsel %vm345, %v1725, %v1710
    %v1727 = vsel %vm347, %v1726, %v1689
    %v1728 = vsel %vm99, %v1727, %v1491
    %v1729 = vsel %vm350, %v1728, %v1712
    %v1730 = vsel %vm601, %v1729, %v1714
    %v1731 = vsel %vm631, %v1730, %v1716
    %v1732 = vrot.slane %v1491, 6
    %v1734 = vrot.slane %v1689, 5
    %v1736 = vrot.slane %v1491, 5
    %v1738 = vrot.slane %v1689, 4
    %v1741 = vrot.slane %v1497, 4
    %v1744 = vrot.slane %v1690, 3
    %v1746 = vrot.slane %v1497, 3
    %v1748 = vrot.slane %v1690, 2
    %v1750 = vrot.slane %v1497, 2
    %v1752 = vrot.slane %v1690, 1
    %v1754 = vrot.slane %v1497, 1
    %v1756 = vsel %vm343, %v1732, %v1734
    %v1757 = vsel %vm345, %v1756, %v1736
    %v1758 = vsel %vm347, %v1757, %v1738
    %v1759 = vsel %vm99, %v1758, %v1741
    %v1760 = vsel %vm350, %v1759, %v1744
    %v1761 = vsel %vm601, %v1760, %v1746
    %v1762 = vsel %vm631, %v1761, %v1748
    %v1763 = vsel %vm343, %v1750, %v1752
    %v1764 = vsel %vm345, %v1763, %v1754
    %v1765 = vsel %vm347, %v1764, %v1690
    %v1770 = vrot.slane %v1724, 4
    %v1771 = vrot.slane %v1731, 4
    %v1772 = vsel %vm99, %v1770, %v1771
    %v1773 = vrot.slane %v1762, 4
    %v1774 = vsel %vm99, %v1771, %v1773
    %v1775 = vrot.slane %v1765, 4
    %v1776 = vsel %vm99, %v1773, %v1775
    %v1781 = vsel %vm99, %v1671, %v1770
    %v1782 = vlaneseq
    %v1783 = vshrl.u32 %v1782, 7
    %v1784 = vsub.s32 3, %v1783
    %v1785 = vrot.slane %v38, %v1784
    %v1786 = vadd.f32 %v1630, %v1785
    %v1787 = vadd.f32 %v1637, %v1785
    %v1788 = vadd.f32 %v1668, %v1785
    %v1789 = vadd.f32 %v1781, %v1785
    %v1790 = vadd.f32 %v1772, %v1785
    %v1791 = vadd.f32 %v1774, %v1785
    %v1792 = vadd.f32 %v1776, %v1785
    %v1793 = vxor.u32 %v1786, 2147483648
    %v1794 = vxor.u32 %v1787, 2147483648
    %v1795 = vxor.u32 %v1788, 2147483648
    %v1796 = vxor.u32 %v1789, 2147483648
    %v1797 = vxor.u32 %v1790, 2147483648
    %v1798 = vxor.u32 %v1791, 2147483648
    %v1799 = vxor.u32 %v1792, 2147483648
    %v1800 = vmul.f32 %v1793, 1.442695
    %v1801 = vpow.pop %v1800
    %v1802 = vmul.f32 %v1794, 1.442695
    %v1803 = vpow.pop %v1802
    %v1804 = vmul.f32 %v1795, 1.442695
    %v1805 = vpow.pop %v1804
    %v1806 = vmul.f32 %v1796, 1.442695
    %v1807 = vpow.pop %v1806
    %v1808 = vmul.f32 %v1797, 1.442695
    %v1809 = vpow.pop %v1808
    %v1810 = vmul.f32 %v1798, 1.442695
    %v1811 = vpow.pop %v1810
    %v1812 = vmul.f32 %v1799, 1.442695
    %v1813 = vpow.pop %v1812
    %v1814 = vadd.f32 %v1801, 1.0
    %v1815 = vadd.f32 %v1803, 1.0
    %v1816 = vadd.f32 %v1805, 1.0
    %v1817 = vadd.f32 %v1807, 1.0
    %v1818 = vadd.f32 %v1809, 1.0
    %v1819 = vadd.f32 %v1811, 1.0
    %v1820 = vadd.f32 %v1813, 1.0
    %v1821 = vrcp.pop %v1814
    %v1822 = vmul.f32 1.0, %v1821
    %v1823 = vrcp.pop %v1815
    %v1824 = vmul.f32 1.0, %v1823
    %v1825 = vrcp.pop %v1816
    %v1826 = vmul.f32 1.0, %v1825
    %v1827 = vrcp.pop %v1817
    %v1828 = vmul.f32 1.0, %v1827
    %v1829 = vrcp.pop %v1818
    %v1830 = vmul.f32 1.0, %v1829
    %v1831 = vrcp.pop %v1819
    %v1832 = vmul.f32 1.0, %v1831
    %v1833 = vrcp.pop %v1820
    %v1834 = vmul.f32 1.0, %v1833
    %1835 = vst [vmem:[#allocation7] sm:$0xff] %v1822
    %1836 = vst [vmem:[#allocation7 + $0x8] sm:$0xff] %v1824
    %1837 = vst [vmem:[#allocation7 + $0x10] sm:$0xff] %v1826
    %1838 = vst [vmem:[#allocation7 + $0x18] sm:$0xff] %v1828
    %1839 = vst [vmem:[#allocation7 + $0x20] sm:$0xff] %v1830
    %1840 = vst [vmem:[#allocation7 + $0x28] sm:$0xff] %v1832
    %1841 = vst [vmem:[#allocation7 + $0x30] sm:$0xff] %v1834
    // Predicated region
    $region18: #{forward.1} parent=1 // pred_check
      _
    $region19: #{forward.1} parent=1 // pred_check_branch
      %1843 = sbr.rel (0) target = $region21
    $region20: #{forward.1} parent=1 // pred_region
      %s1845 = ssub.s32 896, 896
      %1846 = vsyncadd [#allocation4], %s1845
      %s1847 = sshll.u32 [#allocation7], 4
      %s1848 = int_to_ptr.vmem [resolvable:$true] %s1847
      %1853 = dma.vmem_to_hbm [thread:$0]  %s1848, 896, %s2, [#allocation4], 128, 128, 8
    $region21: #{forward.1} parent=1 // pred_fallthru
      _
    // Predicated region
    $region22: #{forward.1} parent=1 // pred_check
      _
    $region23: #{forward.1} parent=1 // pred_check_branch
      %1855 = sbr.rel (0) target = $region25
    $region24: #{forward.1} parent=1 // pred_region
      %1856 = dma.done [#allocation4], 896
    $region25: #{forward.1} parent=1 // pred_fallthru
      _
    %1857 = vsyncpa [#allocation3], 1
    %1858 = vsyncpa [#allocation6], 1
    %1859 = vsyncpa [#allocation4], 1

</llo_original>
